<compile_context>
chip_gen: v5e
topology: v5e:2x2
jax: 0.10.0
libtpu: 0.0.40
codegen_flags: <defaults>
</compile_context>

<pallas_src>
import math

import numpy as np
import jax
import jax.numpy as jnp
from jax import lax
from jax.experimental import pallas as pl
from jax.experimental.pallas import tpu as pltpu

LANE = 128  # channel padding target == vreg lane width


# ----------------------------- fused Pallas kernel ---------------------------

def _make_tcn_kernel(layer_cfgs, *, k, L, C):
    """Whole-network kernel: every TemporalBlock + the Linear head.

    layer_cfgs: tuple of (dilation, has_downsample) per block (static).
    Activation layout: (nb*L, C) -- batch*time on sublanes, channels
    (zero-padded to C == 128) on lanes.  Row r <-> (batch r // L, time r % L).
    """

    def kernel(*refs):
        x_ref = refs[0]
        o_ref = refs[-1]
        params = iter(refs[1:-1])

        rows = x_ref.shape[0]
        # Hoisted once: time index of each row (for causal / batch-boundary mask).
        row_mod = lax.broadcasted_iota(jnp.int32, (rows, C), 0) % L

        def causal_shift(a, s):
            # out[r] = a[r - s] if row r - s lies in the same batch segment,
            # else 0.  Sublane rotation on the XLU + a VPU select; the mask
            # also supplies the causal zero padding at each batch start.
            if s == 0:
                return a
            rolled = pltpu.roll(a, shift=s, axis=0)
            return jnp.where(row_mod >= s, rolled, 0.0)

        def dilated_causal_conv(a, w_ref, b_ref, d):
            # Per-tap accumulation: k (rows,128)@(128,128) bf16 dots with f32
            # accumulation (no im2col concat buffer).
            acc = None
            for j in range(k):
                s = (k - 1 - j) * d
                tap = causal_shift(a, s).astype(jnp.bfloat16)
                part = jnp.dot(tap, w_ref[j * C:(j + 1) * C, :],
                               preferred_element_type=jnp.float32)
                acc = part if acc is None else acc + part
            return acc + b_ref[...]                                  # (rows, C) f32

        h = x_ref[...].astype(jnp.float32)                           # (rows, C)
        for dilation, has_ds in layer_cfgs:
            w1 = next(params); b1 = next(params)
            w2 = next(params); b2 = next(params)
            h1 = jnp.maximum(dilated_causal_conv(h, w1, b1, dilation), 0.0)
            # TODO(synk): nn.Dropout is identity at inference; no RNG mask.
            h2 = jnp.maximum(dilated_causal_conv(h1, w2, b2, dilation), 0.0)
            if has_ds:
                wd = next(params); bd = next(params)
                res = jnp.dot(h.astype(jnp.bfloat16), wd[...],
                              preferred_element_type=jnp.float32) + bd[...]
            else:
                res = h                                    # exact f32 identity
            h = jnp.maximum(h2 + res, 0.0)

        # Fused lane-dense head: Linear(C, 1) padded to (128, 128); only lane 0
        # of the output is meaningful, the wrapper keeps the t == 0 row of each
        # batch (== r_out[:, :, 0] in the PyTorch module).
        wl = next(params); bl = next(params)
        out = jnp.dot(h.astype(jnp.bfloat16), wl[...],
                      preferred_element_type=jnp.float32) + bl[...]
        o_ref[...] = out.astype(o_ref.dtype)

    return kernel


# ----------------------------- wrapper / packing ------------------------------

def _pack_params(block_params, lin_params, *, C):
    """Zero-pad channels to C lanes; conv weights -> per-tap layout (k*C, C)
    in bf16; biases stay f32 (added after f32 accumulation).  The head weight
    is padded to a lane-dense (C, C) bf16 matrix (only column 0 used)."""
    packed, cfgs = [], []
    for i, (w1, b1, w2, b2, wd, bd) in enumerate(block_params):
        def pad_conv(w):                           # (k, cin, cout) -> (k*C, C)
            kk, ci, co = w.shape
            wp = jnp.zeros((kk, C, C), jnp.float32).at[:, :ci, :co].set(w)
            return wp.reshape(kk * C, C).astype(jnp.bfloat16)

        def pad_bias(b):                           # (1, cout) -> (1, C)
            return jnp.zeros((1, C), jnp.float32).at[:, :b.shape[1]].set(b)

        packed += [pad_conv(w1), pad_bias(b1), pad_conv(w2), pad_bias(b2)]
        has_ds = wd is not None
        if has_ds:
            wdp = (jnp.zeros((C, C), jnp.float32)
                   .at[:wd.shape[0], :wd.shape[1]].set(wd))
            packed += [wdp.astype(jnp.bfloat16), pad_bias(bd)]
        cfgs.append((2 ** i, has_ds))

    wl, bl = lin_params
    wlp = (jnp.zeros((C, C), jnp.float32)
           .at[:wl.shape[0], :wl.shape[1]].set(wl)).astype(jnp.bfloat16)
    blp = jnp.zeros((1, C), jnp.float32).at[:, :bl.shape[1]].set(bl)
    packed += [wlp, blp]
    return packed, tuple(cfgs)


def _choose_nb(N, L):
    """Batches per grid step.  Ensures nb*L % 8 == 0 (BlockSpec sublane rule),
    targets ~1024 sublane rows per step, and (when N >= 2) grid >= 2 so v7x's
    two TensorCores both get work under dimension_semantics=('parallel',)."""
    unit = 8 // math.gcd(L, 8)                # smallest nb with nb*L % 8 == 0
    target = max(1, 1024 // L)
    if N >= 2:
        target = min(target, (N + 1) // 2)    # at least 2 grid steps
    return ((max(target, 1) + unit - 1) // unit) * unit


def temporal_conv_net(x_ncl, block_params, lin_params, *, kernel_size=2):
    """TemporalConvNet forward: (N, Cin, L) -> (N, 1)."""
    N, cin, L = x_ncl.shape
    C, k = LANE, kernel_size
    # TODO(synk): channel counts > 128 would need channel tiling; not supported
    # by this single-lane-tile packing.
    assert cin <= C and all(max(b[0].shape[2], b[2].shape[2]) <= C
                            for b in block_params)

    nb = _choose_nb(N, L)
    n_pad = ((N + nb - 1) // nb) * nb
    grid = (n_pad // nb,)

    # One-time layout plumbing in plain JAX: (N, Cin, L) -> (n_pad*L, 128) bf16.
    x_flat = jnp.transpose(x_ncl, (0, 2, 1)).reshape(N * L, cin)
    x_flat = jnp.pad(x_flat.astype(jnp.float32),
                     ((0, (n_pad - N) * L), (0, C - cin))).astype(jnp.bfloat16)

    packed, cfgs = _pack_params(block_params, lin_params, C=C)

    in_specs = [pl.BlockSpec((nb * L, C), lambda b: (b, 0))]
    in_specs += [pl.BlockSpec(w.shape, lambda b: (0, 0)) for w in packed]

    out_all = pl.pallas_call(
        _make_tcn_kernel(cfgs, k=k, L=L, C=C),
        out_shape=jax.ShapeDtypeStruct((n_pad * L, C), jnp.float32),
        grid=grid,
        in_specs=in_specs,
        out_specs=pl.BlockSpec((nb * L, C), lambda b: (b, 0)),
        compiler_params=pltpu.CompilerParams(
            dimension_semantics=("parallel",),
            vmem_limit_bytes=32 * 1024 * 1024),
    )(x_flat, *packed)

    # Padded batch rows get bias+ReLU garbage; they are sliced away here and
    # must never be reduced over in-kernel.  Head reads the t == 0 time step
    # (r_out[:, :, 0]) and lane 0 of the lane-dense output.
    return out_all.reshape(n_pad, L, C)[:N, 0, :1]


# ----------------------------- parameters & reference ------------------------

def init_params(key, num_inputs, num_channels, kernel_size=2):
    """Deterministic synthetic parameters.  Conv weights stored as
    (k, cin, cout) (= transpose of PyTorch's (cout, cin, k)); biases (1, cout).
    weight_norm is folded into plain dense weights (forward-equivalent)."""
    block_params = []
    cin = num_inputs
    for cout in num_channels:
        key, k1, k2, k3, k4, k5, k6 = jax.random.split(key, 7)
        w1 = 0.1 * jax.random.normal(k1, (kernel_size, cin, cout), jnp.float32)
        b1 = 0.1 * jax.random.normal(k2, (1, cout), jnp.float32)
        w2 = 0.1 * jax.random.normal(k3, (kernel_size, cout, cout), jnp.float32)
        b2 = 0.1 * jax.random.normal(k4, (1, cout), jnp.float32)
        if cin != cout:
            wd = 0.1 * jax.random.normal(k5, (cin, cout), jnp.float32)
            bd = 0.1 * jax.random.normal(k6, (1, cout), jnp.float32)
        else:
            wd, bd = None, None
        block_params.append((w1, b1, w2, b2, wd, bd))
        cin = cout
    key, k1, k2 = jax.random.split(key, 3)
    wl = 0.1 * jax.random.normal(k1, (cin, 1), jnp.float32)     # Linear(C, 1)
    bl = 0.1 * jax.random.normal(k2, (1, 1), jnp.float32)
    return block_params, (wl, bl)


def reference_forward(x_ncl, block_params, lin_params, *, kernel_size=2):
    """Pure-JAX (XLA conv) f32 reference mirroring the PyTorch module."""
    h = x_ncl.astype(jnp.float32)
    for i, (w1, b1, w2, b2, wd, bd) in enumerate(block_params):
        d = 2 ** i
        p = (kernel_size - 1) * d

        def conv(inp, w, b):
            tw = jnp.transpose(w, (2, 1, 0))   # (k, cin, cout) -> (cout, cin, k)
            y = lax.conv_general_dilated(
                inp, tw, window_strides=(1,), padding=[(p, 0)],
                rhs_dilation=(d,), dimension_numbers=("NCH", "OIH", "NCH"))
            return y + b.reshape(-1)[None, :, None]

        a1 = jnp.maximum(conv(h, w1, b1), 0.0)
        a2 = jnp.maximum(conv(a1, w2, b2), 0.0)
        if wd is None:
            res = h
        else:
            res = jnp.einsum("ncl,co->nol", h, wd) + bd.reshape(-1)[None, :, None]
        h = jnp.maximum(a2 + res, 0.0)
    wl, bl = lin_params
    return h[:, :, 0] @ wl + bl


# ----------------------------- main -------------------------------------------

if __name__ == "__main__":
    key = jax.random.PRNGKey(0)
    kx, kp = jax.random.split(key)

    N, num_inputs, L = 2, 4, 16
    num_channels = (8, 8, 16)   # dilations 1, 2, 4; middle block has no downsample
    kernel_size = 2

    # PyTorch Conv1d input layout (N, C, L)
    x = jax.random.normal(kx, (N, num_inputs, L), jnp.float32)
    block_params, lin_params = init_params(kp, num_inputs, num_channels,
                                           kernel_size=kernel_size)

    out = temporal_conv_net(x, block_params, lin_params, kernel_size=kernel_size)
    out = jax.block_until_ready(out)

    ref = reference_forward(x, block_params, lin_params, kernel_size=kernel_size)
    # bf16 matmul operands (f32 accumulation) vs an all-f32 XLA reference.
    np.testing.assert_allclose(np.asarray(out), np.asarray(ref),
                               rtol=2e-2, atol=2e-2)
    print("KERNEL_OK")
</pallas_src>

<mosaic_0001>
module attributes {stable_mosaic.version = 11 : i64} {
  func.func @kernel(%arg0: i32, %arg1: memref<16x128xbf16, #tpu.memory_space<vmem>>, %arg2: memref<256x128xbf16, #tpu.memory_space<vmem>>, %arg3: memref<1x128xf32, #tpu.memory_space<vmem>>, %arg4: memref<256x128xbf16, #tpu.memory_space<vmem>>, %arg5: memref<1x128xf32, #tpu.memory_space<vmem>>, %arg6: memref<128x128xbf16, #tpu.memory_space<vmem>>, %arg7: memref<1x128xf32, #tpu.memory_space<vmem>>, %arg8: memref<256x128xbf16, #tpu.memory_space<vmem>>, %arg9: memref<1x128xf32, #tpu.memory_space<vmem>>, %arg10: memref<256x128xbf16, #tpu.memory_space<vmem>>, %arg11: memref<1x128xf32, #tpu.memory_space<vmem>>, %arg12: memref<256x128xbf16, #tpu.memory_space<vmem>>, %arg13: memref<1x128xf32, #tpu.memory_space<vmem>>, %arg14: memref<256x128xbf16, #tpu.memory_space<vmem>>, %arg15: memref<1x128xf32, #tpu.memory_space<vmem>>, %arg16: memref<128x128xbf16, #tpu.memory_space<vmem>>, %arg17: memref<1x128xf32, #tpu.memory_space<vmem>>, %arg18: memref<128x128xbf16, #tpu.memory_space<vmem>>, %arg19: memref<1x128xf32, #tpu.memory_space<vmem>>, %arg20: memref<16x128xf32, #tpu.memory_space<vmem>>) attributes {dimension_semantics = [#tpu.dimension_semantics<parallel>], iteration_bounds = array<i64: 2>, scalar_prefetch = 0 : i64, scratch_operands = 0 : i64, tpu.core_type = #tpu.core_type<tc>, window_params = [{transform_indices = @transform_0, window_bounds = array<i64: 16, 128>}, {pipeline_mode = #tpu.pipeline_mode<synchronous>, transform_indices = @transform_1, window_bounds = array<i64: 256, 128>}, {pipeline_mode = #tpu.pipeline_mode<synchronous>, transform_indices = @transform_2, window_bounds = array<i64: 1, 128>}, {pipeline_mode = #tpu.pipeline_mode<synchronous>, transform_indices = @transform_3, window_bounds = array<i64: 256, 128>}, {pipeline_mode = #tpu.pipeline_mode<synchronous>, transform_indices = @transform_4, window_bounds = array<i64: 1, 128>}, {pipeline_mode = #tpu.pipeline_mode<synchronous>, transform_indices = @transform_5, window_bounds = array<i64: 128, 128>}, {pipeline_mode = #tpu.pipeline_mode<synchronous>, transform_indices = @transform_6, window_bounds = array<i64: 1, 128>}, {pipeline_mode = #tpu.pipeline_mode<synchronous>, transform_indices = @transform_7, window_bounds = array<i64: 256, 128>}, {pipeline_mode = #tpu.pipeline_mode<synchronous>, transform_indices = @transform_8, window_bounds = array<i64: 1, 128>}, {pipeline_mode = #tpu.pipeline_mode<synchronous>, transform_indices = @transform_9, window_bounds = array<i64: 256, 128>}, {pipeline_mode = #tpu.pipeline_mode<synchronous>, transform_indices = @transform_10, window_bounds = array<i64: 1, 128>}, {pipeline_mode = #tpu.pipeline_mode<synchronous>, transform_indices = @transform_11, window_bounds = array<i64: 256, 128>}, {pipeline_mode = #tpu.pipeline_mode<synchronous>, transform_indices = @transform_12, window_bounds = array<i64: 1, 128>}, {pipeline_mode = #tpu.pipeline_mode<synchronous>, transform_indices = @transform_13, window_bounds = array<i64: 256, 128>}, {pipeline_mode = #tpu.pipeline_mode<synchronous>, transform_indices = @transform_14, window_bounds = array<i64: 1, 128>}, {pipeline_mode = #tpu.pipeline_mode<synchronous>, transform_indices = @transform_15, window_bounds = array<i64: 128, 128>}, {pipeline_mode = #tpu.pipeline_mode<synchronous>, transform_indices = @transform_16, window_bounds = array<i64: 1, 128>}, {pipeline_mode = #tpu.pipeline_mode<synchronous>, transform_indices = @transform_17, window_bounds = array<i64: 128, 128>}, {pipeline_mode = #tpu.pipeline_mode<synchronous>, transform_indices = @transform_18, window_bounds = array<i64: 1, 128>}, {transform_indices = @transform_19, window_bounds = array<i64: 16, 128>}]} {
    %0 = tpu.iota {dimensions = array<i32: 0>} : vector<16x128xi32>
    %c16_i32 = arith.constant 16 : i32
    %c0_i32 = arith.constant 0 : i32
    %1 = arith.cmpi eq, %c16_i32, %c0_i32 : i32
    %c1_i32 = arith.constant 1 : i32
    %2 = arith.select %1, %c1_i32, %c16_i32 : i32
    %3 = vector.broadcast %2 : i32 to vector<16x128xi32>
    %4 = arith.remsi %0, %3 : vector<16x128xi32>
    %c0_i32_0 = arith.constant 0 : i32
    %5 = vector.broadcast %c0_i32_0 : i32 to vector<16x128xi32>
    %6 = arith.cmpi ne, %4, %5 : vector<16x128xi32>
    %c0_i32_1 = arith.constant 0 : i32
    %7 = vector.broadcast %c0_i32_1 : i32 to vector<16x128xi32>
    %8 = arith.cmpi slt, %4, %7 : vector<16x128xi32>
    %c0_i32_2 = arith.constant 0 : i32
    %9 = arith.cmpi slt, %2, %c0_i32_2 : i32
    %10 = vector.broadcast %9 : i1 to vector<16x128xi1>
    %11 = vector.broadcast %10 : vector<16x128xi1> to vector<16x128xi1>
    %12 = arith.xori %8, %11 : vector<16x128xi1>
    %13 = arith.andi %12, %6 : vector<16x128xi1>
    %14 = vector.broadcast %2 : i32 to vector<16x128xi32>
    %15 = arith.addi %4, %14 : vector<16x128xi32>
    %16 = arith.select %13, %15, %4 : vector<16x128xi1>, vector<16x128xi32>
    %c0 = arith.constant 0 : index
    %c0_3 = arith.constant 0 : index
    %17 = vector.load %arg1[%c0, %c0_3] : memref<16x128xbf16, #tpu.memory_space<vmem>>, vector<16x128xbf16>
    %18 = arith.extf %17 : vector<16x128xbf16> to vector<16x128xf32>
    %c1_i32_4 = arith.constant 1 : i32
    %19 = tpu.dynamic_rotate %18 by %c1_i32_4 dim 0 : vector<16x128xf32>, i32 -> vector<16x128xf32>
    %c1_i32_5 = arith.constant 1 : i32
    %20 = vector.broadcast %c1_i32_5 : i32 to vector<16x128xi32>
    %21 = arith.cmpi sge, %16, %20 : vector<16x128xi32>
    %cst = arith.constant 0.000000e+00 : f32
    %22 = vector.broadcast %cst : f32 to vector<16x128xf32>
    %23 = arith.select %21, %19, %22 : vector<16x128xi1>, vector<16x128xf32>
    %24 = arith.truncf %23 : vector<16x128xf32> to vector<16x128xbf16>
    %c0_6 = arith.constant 0 : index
    %c0_7 = arith.constant 0 : index
    %25 = vector.load %arg2[%c0_6, %c0_7] : memref<256x128xbf16, #tpu.memory_space<vmem>>, vector<128x128xbf16>
    %cst_8 = arith.constant dense<0.000000e+00> : vector<16x128xf32>
    %26 = tpu.matmul %24, %25, %cst_8 {dimension_numbers = #tpu.dot_dimension_numbers<[1], [0], [0], [1], [0, 0, 1, 1], [], []>} : vector<16x128xbf16>, vector<128x128xbf16>, vector<16x128xf32> -> vector<16x128xf32>
    %27 = arith.truncf %18 : vector<16x128xf32> to vector<16x128xbf16>
    %c128 = arith.constant 128 : index
    %c0_9 = arith.constant 0 : index
    %28 = vector.load %arg2[%c128, %c0_9] : memref<256x128xbf16, #tpu.memory_space<vmem>>, vector<128x128xbf16>
    %cst_10 = arith.constant dense<0.000000e+00> : vector<16x128xf32>
    %29 = tpu.matmul %27, %28, %cst_10 {dimension_numbers = #tpu.dot_dimension_numbers<[1], [0], [0], [1], [0, 0, 1, 1], [], []>} : vector<16x128xbf16>, vector<128x128xbf16>, vector<16x128xf32> -> vector<16x128xf32>
    %30 = arith.addf %26, %29 : vector<16x128xf32>
    %c0_11 = arith.constant 0 : index
    %c0_12 = arith.constant 0 : index
    %31 = vector.load %arg3[%c0_11, %c0_12] : memref<1x128xf32, #tpu.memory_space<vmem>>, vector<1x128xf32>
    %32 = vector.broadcast %31 : vector<1x128xf32> to vector<16x128xf32>
    %33 = arith.addf %30, %32 : vector<16x128xf32>
    %cst_13 = arith.constant 0.000000e+00 : f32
    %34 = vector.broadcast %cst_13 : f32 to vector<16x128xf32>
    %35 = arith.maximumf %33, %34 : vector<16x128xf32>
    %c1_i32_14 = arith.constant 1 : i32
    %36 = tpu.dynamic_rotate %35 by %c1_i32_14 dim 0 : vector<16x128xf32>, i32 -> vector<16x128xf32>
    %c1_i32_15 = arith.constant 1 : i32
    %37 = vector.broadcast %c1_i32_15 : i32 to vector<16x128xi32>
    %38 = arith.cmpi sge, %16, %37 : vector<16x128xi32>
    %cst_16 = arith.constant 0.000000e+00 : f32
    %39 = vector.broadcast %cst_16 : f32 to vector<16x128xf32>
    %40 = arith.select %38, %36, %39 : vector<16x128xi1>, vector<16x128xf32>
    %41 = arith.truncf %40 : vector<16x128xf32> to vector<16x128xbf16>
    %c0_17 = arith.constant 0 : index
    %c0_18 = arith.constant 0 : index
    %42 = vector.load %arg4[%c0_17, %c0_18] : memref<256x128xbf16, #tpu.memory_space<vmem>>, vector<128x128xbf16>
    %cst_19 = arith.constant dense<0.000000e+00> : vector<16x128xf32>
    %43 = tpu.matmul %41, %42, %cst_19 {dimension_numbers = #tpu.dot_dimension_numbers<[1], [0], [0], [1], [0, 0, 1, 1], [], []>} : vector<16x128xbf16>, vector<128x128xbf16>, vector<16x128xf32> -> vector<16x128xf32>
    %44 = arith.truncf %35 : vector<16x128xf32> to vector<16x128xbf16>
    %c128_20 = arith.constant 128 : index
    %c0_21 = arith.constant 0 : index
    %45 = vector.load %arg4[%c128_20, %c0_21] : memref<256x128xbf16, #tpu.memory_space<vmem>>, vector<128x128xbf16>
    %cst_22 = arith.constant dense<0.000000e+00> : vector<16x128xf32>
    %46 = tpu.matmul %44, %45, %cst_22 {dimension_numbers = #tpu.dot_dimension_numbers<[1], [0], [0], [1], [0, 0, 1, 1], [], []>} : vector<16x128xbf16>, vector<128x128xbf16>, vector<16x128xf32> -> vector<16x128xf32>
    %47 = arith.addf %43, %46 : vector<16x128xf32>
    %c0_23 = arith.constant 0 : index
    %c0_24 = arith.constant 0 : index
    %48 = vector.load %arg5[%c0_23, %c0_24] : memref<1x128xf32, #tpu.memory_space<vmem>>, vector<1x128xf32>
    %49 = vector.broadcast %48 : vector<1x128xf32> to vector<16x128xf32>
    %50 = arith.addf %47, %49 : vector<16x128xf32>
    %cst_25 = arith.constant 0.000000e+00 : f32
    %51 = vector.broadcast %cst_25 : f32 to vector<16x128xf32>
    %52 = arith.maximumf %50, %51 : vector<16x128xf32>
    %53 = arith.truncf %18 : vector<16x128xf32> to vector<16x128xbf16>
    %c0_26 = arith.constant 0 : index
    %c0_27 = arith.constant 0 : index
    %54 = vector.load %arg6[%c0_26, %c0_27] : memref<128x128xbf16, #tpu.memory_space<vmem>>, vector<128x128xbf16>
    %cst_28 = arith.constant dense<0.000000e+00> : vector<16x128xf32>
    %55 = tpu.matmul %53, %54, %cst_28 {dimension_numbers = #tpu.dot_dimension_numbers<[1], [0], [0], [1], [0, 0, 1, 1], [], []>} : vector<16x128xbf16>, vector<128x128xbf16>, vector<16x128xf32> -> vector<16x128xf32>
    %c0_29 = arith.constant 0 : index
    %c0_30 = arith.constant 0 : index
    %56 = vector.load %arg7[%c0_29, %c0_30] : memref<1x128xf32, #tpu.memory_space<vmem>>, vector<1x128xf32>
    %57 = vector.broadcast %56 : vector<1x128xf32> to vector<16x128xf32>
    %58 = arith.addf %55, %57 : vector<16x128xf32>
    %59 = arith.addf %52, %58 : vector<16x128xf32>
    %cst_31 = arith.constant 0.000000e+00 : f32
    %60 = vector.broadcast %cst_31 : f32 to vector<16x128xf32>
    %61 = arith.maximumf %59, %60 : vector<16x128xf32>
    %c2_i32 = arith.constant 2 : i32
    %62 = tpu.dynamic_rotate %61 by %c2_i32 dim 0 : vector<16x128xf32>, i32 -> vector<16x128xf32>
    %c2_i32_32 = arith.constant 2 : i32
    %63 = vector.broadcast %c2_i32_32 : i32 to vector<16x128xi32>
    %64 = arith.cmpi sge, %16, %63 : vector<16x128xi32>
    %cst_33 = arith.constant 0.000000e+00 : f32
    %65 = vector.broadcast %cst_33 : f32 to vector<16x128xf32>
    %66 = arith.select %64, %62, %65 : vector<16x128xi1>, vector<16x128xf32>
    %67 = arith.truncf %66 : vector<16x128xf32> to vector<16x128xbf16>
    %c0_34 = arith.constant 0 : index
    %c0_35 = arith.constant 0 : index
    %68 = vector.load %arg8[%c0_34, %c0_35] : memref<256x128xbf16, #tpu.memory_space<vmem>>, vector<128x128xbf16>
    %cst_36 = arith.constant dense<0.000000e+00> : vector<16x128xf32>
    %69 = tpu.matmul %67, %68, %cst_36 {dimension_numbers = #tpu.dot_dimension_numbers<[1], [0], [0], [1], [0, 0, 1, 1], [], []>} : vector<16x128xbf16>, vector<128x128xbf16>, vector<16x128xf32> -> vector<16x128xf32>
    %70 = arith.truncf %61 : vector<16x128xf32> to vector<16x128xbf16>
    %c128_37 = arith.constant 128 : index
    %c0_38 = arith.constant 0 : index
    %71 = vector.load %arg8[%c128_37, %c0_38] : memref<256x128xbf16, #tpu.memory_space<vmem>>, vector<128x128xbf16>
    %cst_39 = arith.constant dense<0.000000e+00> : vector<16x128xf32>
    %72 = tpu.matmul %70, %71, %cst_39 {dimension_numbers = #tpu.dot_dimension_numbers<[1], [0], [0], [1], [0, 0, 1, 1], [], []>} : vector<16x128xbf16>, vector<128x128xbf16>, vector<16x128xf32> -> vector<16x128xf32>
    %73 = arith.addf %69, %72 : vector<16x128xf32>
    %c0_40 = arith.constant 0 : index
    %c0_41 = arith.constant 0 : index
    %74 = vector.load %arg9[%c0_40, %c0_41] : memref<1x128xf32, #tpu.memory_space<vmem>>, vector<1x128xf32>
    %75 = vector.broadcast %74 : vector<1x128xf32> to vector<16x128xf32>
    %76 = arith.addf %73, %75 : vector<16x128xf32>
    %cst_42 = arith.constant 0.000000e+00 : f32
    %77 = vector.broadcast %cst_42 : f32 to vector<16x128xf32>
    %78 = arith.maximumf %76, %77 : vector<16x128xf32>
    %c2_i32_43 = arith.constant 2 : i32
    %79 = tpu.dynamic_rotate %78 by %c2_i32_43 dim 0 : vector<16x128xf32>, i32 -> vector<16x128xf32>
    %c2_i32_44 = arith.constant 2 : i32
    %80 = vector.broadcast %c2_i32_44 : i32 to vector<16x128xi32>
    %81 = arith.cmpi sge, %16, %80 : vector<16x128xi32>
    %cst_45 = arith.constant 0.000000e+00 : f32
    %82 = vector.broadcast %cst_45 : f32 to vector<16x128xf32>
    %83 = arith.select %81, %79, %82 : vector<16x128xi1>, vector<16x128xf32>
    %84 = arith.truncf %83 : vector<16x128xf32> to vector<16x128xbf16>
    %c0_46 = arith.constant 0 : index
    %c0_47 = arith.constant 0 : index
    %85 = vector.load %arg10[%c0_46, %c0_47] : memref<256x128xbf16, #tpu.memory_space<vmem>>, vector<128x128xbf16>
    %cst_48 = arith.constant dense<0.000000e+00> : vector<16x128xf32>
    %86 = tpu.matmul %84, %85, %cst_48 {dimension_numbers = #tpu.dot_dimension_numbers<[1], [0], [0], [1], [0, 0, 1, 1], [], []>} : vector<16x128xbf16>, vector<128x128xbf16>, vector<16x128xf32> -> vector<16x128xf32>
    %87 = arith.truncf %78 : vector<16x128xf32> to vector<16x128xbf16>
    %c128_49 = arith.constant 128 : index
    %c0_50 = arith.constant 0 : index
    %88 = vector.load %arg10[%c128_49, %c0_50] : memref<256x128xbf16, #tpu.memory_space<vmem>>, vector<128x128xbf16>
    %cst_51 = arith.constant dense<0.000000e+00> : vector<16x128xf32>
    %89 = tpu.matmul %87, %88, %cst_51 {dimension_numbers = #tpu.dot_dimension_numbers<[1], [0], [0], [1], [0, 0, 1, 1], [], []>} : vector<16x128xbf16>, vector<128x128xbf16>, vector<16x128xf32> -> vector<16x128xf32>
    %90 = arith.addf %86, %89 : vector<16x128xf32>
    %c0_52 = arith.constant 0 : index
    %c0_53 = arith.constant 0 : index
    %91 = vector.load %arg11[%c0_52, %c0_53] : memref<1x128xf32, #tpu.memory_space<vmem>>, vector<1x128xf32>
    %92 = vector.broadcast %91 : vector<1x128xf32> to vector<16x128xf32>
    %93 = arith.addf %90, %92 : vector<16x128xf32>
    %cst_54 = arith.constant 0.000000e+00 : f32
    %94 = vector.broadcast %cst_54 : f32 to vector<16x128xf32>
    %95 = arith.maximumf %93, %94 : vector<16x128xf32>
    %96 = arith.addf %95, %61 : vector<16x128xf32>
    %cst_55 = arith.constant 0.000000e+00 : f32
    %97 = vector.broadcast %cst_55 : f32 to vector<16x128xf32>
    %98 = arith.maximumf %96, %97 : vector<16x128xf32>
    %c4_i32 = arith.constant 4 : i32
    %99 = tpu.dynamic_rotate %98 by %c4_i32 dim 0 : vector<16x128xf32>, i32 -> vector<16x128xf32>
    %c4_i32_56 = arith.constant 4 : i32
    %100 = vector.broadcast %c4_i32_56 : i32 to vector<16x128xi32>
    %101 = arith.cmpi sge, %16, %100 : vector<16x128xi32>
    %cst_57 = arith.constant 0.000000e+00 : f32
    %102 = vector.broadcast %cst_57 : f32 to vector<16x128xf32>
    %103 = arith.select %101, %99, %102 : vector<16x128xi1>, vector<16x128xf32>
    %104 = arith.truncf %103 : vector<16x128xf32> to vector<16x128xbf16>
    %c0_58 = arith.constant 0 : index
    %c0_59 = arith.constant 0 : index
    %105 = vector.load %arg12[%c0_58, %c0_59] : memref<256x128xbf16, #tpu.memory_space<vmem>>, vector<128x128xbf16>
    %cst_60 = arith.constant dense<0.000000e+00> : vector<16x128xf32>
    %106 = tpu.matmul %104, %105, %cst_60 {dimension_numbers = #tpu.dot_dimension_numbers<[1], [0], [0], [1], [0, 0, 1, 1], [], []>} : vector<16x128xbf16>, vector<128x128xbf16>, vector<16x128xf32> -> vector<16x128xf32>
    %107 = arith.truncf %98 : vector<16x128xf32> to vector<16x128xbf16>
    %c128_61 = arith.constant 128 : index
    %c0_62 = arith.constant 0 : index
    %108 = vector.load %arg12[%c128_61, %c0_62] : memref<256x128xbf16, #tpu.memory_space<vmem>>, vector<128x128xbf16>
    %cst_63 = arith.constant dense<0.000000e+00> : vector<16x128xf32>
    %109 = tpu.matmul %107, %108, %cst_63 {dimension_numbers = #tpu.dot_dimension_numbers<[1], [0], [0], [1], [0, 0, 1, 1], [], []>} : vector<16x128xbf16>, vector<128x128xbf16>, vector<16x128xf32> -> vector<16x128xf32>
    %110 = arith.addf %106, %109 : vector<16x128xf32>
    %c0_64 = arith.constant 0 : index
    %c0_65 = arith.constant 0 : index
    %111 = vector.load %arg13[%c0_64, %c0_65] : memref<1x128xf32, #tpu.memory_space<vmem>>, vector<1x128xf32>
    %112 = vector.broadcast %111 : vector<1x128xf32> to vector<16x128xf32>
    %113 = arith.addf %110, %112 : vector<16x128xf32>
    %cst_66 = arith.constant 0.000000e+00 : f32
    %114 = vector.broadcast %cst_66 : f32 to vector<16x128xf32>
    %115 = arith.maximumf %113, %114 : vector<16x128xf32>
    %c4_i32_67 = arith.constant 4 : i32
    %116 = tpu.dynamic_rotate %115 by %c4_i32_67 dim 0 : vector<16x128xf32>, i32 -> vector<16x128xf32>
    %c4_i32_68 = arith.constant 4 : i32
    %117 = vector.broadcast %c4_i32_68 : i32 to vector<16x128xi32>
    %118 = arith.cmpi sge, %16, %117 : vector<16x128xi32>
    %cst_69 = arith.constant 0.000000e+00 : f32
    %119 = vector.broadcast %cst_69 : f32 to vector<16x128xf32>
    %120 = arith.select %118, %116, %119 : vector<16x128xi1>, vector<16x128xf32>
    %121 = arith.truncf %120 : vector<16x128xf32> to vector<16x128xbf16>
    %c0_70 = arith.constant 0 : index
    %c0_71 = arith.constant 0 : index
    %122 = vector.load %arg14[%c0_70, %c0_71] : memref<256x128xbf16, #tpu.memory_space<vmem>>, vector<128x128xbf16>
    %cst_72 = arith.constant dense<0.000000e+00> : vector<16x128xf32>
    %123 = tpu.matmul %121, %122, %cst_72 {dimension_numbers = #tpu.dot_dimension_numbers<[1], [0], [0], [1], [0, 0, 1, 1], [], []>} : vector<16x128xbf16>, vector<128x128xbf16>, vector<16x128xf32> -> vector<16x128xf32>
    %124 = arith.truncf %115 : vector<16x128xf32> to vector<16x128xbf16>
    %c128_73 = arith.constant 128 : index
    %c0_74 = arith.constant 0 : index
    %125 = vector.load %arg14[%c128_73, %c0_74] : memref<256x128xbf16, #tpu.memory_space<vmem>>, vector<128x128xbf16>
    %cst_75 = arith.constant dense<0.000000e+00> : vector<16x128xf32>
    %126 = tpu.matmul %124, %125, %cst_75 {dimension_numbers = #tpu.dot_dimension_numbers<[1], [0], [0], [1], [0, 0, 1, 1], [], []>} : vector<16x128xbf16>, vector<128x128xbf16>, vector<16x128xf32> -> vector<16x128xf32>
    %127 = arith.addf %123, %126 : vector<16x128xf32>
    %c0_76 = arith.constant 0 : index
    %c0_77 = arith.constant 0 : index
    %128 = vector.load %arg15[%c0_76, %c0_77] : memref<1x128xf32, #tpu.memory_space<vmem>>, vector<1x128xf32>
    %129 = vector.broadcast %128 : vector<1x128xf32> to vector<16x128xf32>
    %130 = arith.addf %127, %129 : vector<16x128xf32>
    %cst_78 = arith.constant 0.000000e+00 : f32
    %131 = vector.broadcast %cst_78 : f32 to vector<16x128xf32>
    %132 = arith.maximumf %130, %131 : vector<16x128xf32>
    %133 = arith.truncf %98 : vector<16x128xf32> to vector<16x128xbf16>
    %c0_79 = arith.constant 0 : index
    %c0_80 = arith.constant 0 : index
    %134 = vector.load %arg16[%c0_79, %c0_80] : memref<128x128xbf16, #tpu.memory_space<vmem>>, vector<128x128xbf16>
    %cst_81 = arith.constant dense<0.000000e+00> : vector<16x128xf32>
    %135 = tpu.matmul %133, %134, %cst_81 {dimension_numbers = #tpu.dot_dimension_numbers<[1], [0], [0], [1], [0, 0, 1, 1], [], []>} : vector<16x128xbf16>, vector<128x128xbf16>, vector<16x128xf32> -> vector<16x128xf32>
    %c0_82 = arith.constant 0 : index
    %c0_83 = arith.constant 0 : index
    %136 = vector.load %arg17[%c0_82, %c0_83] : memref<1x128xf32, #tpu.memory_space<vmem>>, vector<1x128xf32>
    %137 = vector.broadcast %136 : vector<1x128xf32> to vector<16x128xf32>
    %138 = arith.addf %135, %137 : vector<16x128xf32>
    %139 = arith.addf %132, %138 : vector<16x128xf32>
    %cst_84 = arith.constant 0.000000e+00 : f32
    %140 = vector.broadcast %cst_84 : f32 to vector<16x128xf32>
    %141 = arith.maximumf %139, %140 : vector<16x128xf32>
    %142 = arith.truncf %141 : vector<16x128xf32> to vector<16x128xbf16>
    %c0_85 = arith.constant 0 : index
    %c0_86 = arith.constant 0 : index
    %143 = vector.load %arg18[%c0_85, %c0_86] : memref<128x128xbf16, #tpu.memory_space<vmem>>, vector<128x128xbf16>
    %cst_87 = arith.constant dense<0.000000e+00> : vector<16x128xf32>
    %144 = tpu.matmul %142, %143, %cst_87 {dimension_numbers = #tpu.dot_dimension_numbers<[1], [0], [0], [1], [0, 0, 1, 1], [], []>} : vector<16x128xbf16>, vector<128x128xbf16>, vector<16x128xf32> -> vector<16x128xf32>
    %c0_88 = arith.constant 0 : index
    %c0_89 = arith.constant 0 : index
    %145 = vector.load %arg19[%c0_88, %c0_89] : memref<1x128xf32, #tpu.memory_space<vmem>>, vector<1x128xf32>
    %146 = vector.broadcast %145 : vector<1x128xf32> to vector<16x128xf32>
    %147 = arith.addf %144, %146 : vector<16x128xf32>
    %c0_90 = arith.constant 0 : index
    %c0_91 = arith.constant 0 : index
    %148 = vector.load %arg20[%c0_90, %c0_91] : memref<16x128xf32, #tpu.memory_space<vmem>>, vector<16x128xf32>
    tpu.vector_store %arg20[%c0_90, %c0_91], %147 {strides = array<i32>} : memref<16x128xf32, #tpu.memory_space<vmem>>, vector<16x128xf32>,
    return
  }
  func.func @transform_0(%arg0: i32) -> (i32, i32) {
    %c0_i32 = arith.constant 0 : i32
    %c0_i32_0 = arith.constant 0 : i32
    return %arg0, %c0_i32 : i32, i32
  }
  func.func @transform_1(%arg0: i32) -> (i32, i32) {
    %c0_i32 = arith.constant 0 : i32
    %c0_i32_0 = arith.constant 0 : i32
    %c0_i32_1 = arith.constant 0 : i32
    return %c0_i32, %c0_i32_0 : i32, i32
  }
  func.func @transform_2(%arg0: i32) -> (i32, i32) {
    %c0_i32 = arith.constant 0 : i32
    %c0_i32_0 = arith.constant 0 : i32
    %c0_i32_1 = arith.constant 0 : i32
    return %c0_i32, %c0_i32_0 : i32, i32
  }
  func.func @transform_3(%arg0: i32) -> (i32, i32) {
    %c0_i32 = arith.constant 0 : i32
    %c0_i32_0 = arith.constant 0 : i32
    %c0_i32_1 = arith.constant 0 : i32
    return %c0_i32, %c0_i32_0 : i32, i32
  }
  func.func @transform_4(%arg0: i32) -> (i32, i32) {
    %c0_i32 = arith.constant 0 : i32
    %c0_i32_0 = arith.constant 0 : i32
    %c0_i32_1 = arith.constant 0 : i32
    return %c0_i32, %c0_i32_0 : i32, i32
  }
  func.func @transform_5(%arg0: i32) -> (i32, i32) {
    %c0_i32 = arith.constant 0 : i32
    %c0_i32_0 = arith.constant 0 : i32
    %c0_i32_1 = arith.constant 0 : i32
    return %c0_i32, %c0_i32_0 : i32, i32
  }
  func.func @transform_6(%arg0: i32) -> (i32, i32) {
    %c0_i32 = arith.constant 0 : i32
    %c0_i32_0 = arith.constant 0 : i32
    %c0_i32_1 = arith.constant 0 : i32
    return %c0_i32, %c0_i32_0 : i32, i32
  }
  func.func @transform_7(%arg0: i32) -> (i32, i32) {
    %c0_i32 = arith.constant 0 : i32
    %c0_i32_0 = arith.constant 0 : i32
    %c0_i32_1 = arith.constant 0 : i32
    return %c0_i32, %c0_i32_0 : i32, i32
  }
  func.func @transform_8(%arg0: i32) -> (i32, i32) {
    %c0_i32 = arith.constant 0 : i32
    %c0_i32_0 = arith.constant 0 : i32
    %c0_i32_1 = arith.constant 0 : i32
    return %c0_i32, %c0_i32_0 : i32, i32
  }
  func.func @transform_9(%arg0: i32) -> (i32, i32) {
    %c0_i32 = arith.constant 0 : i32
    %c0_i32_0 = arith.constant 0 : i32
    %c0_i32_1 = arith.constant 0 : i32
    return %c0_i32, %c0_i32_0 : i32, i32
  }
  func.func @transform_10(%arg0: i32) -> (i32, i32) {
    %c0_i32 = arith.constant 0 : i32
    %c0_i32_0 = arith.constant 0 : i32
    %c0_i32_1 = arith.constant 0 : i32
    return %c0_i32, %c0_i32_0 : i32, i32
  }
  func.func @transform_11(%arg0: i32) -> (i32, i32) {
    %c0_i32 = arith.constant 0 : i32
    %c0_i32_0 = arith.constant 0 : i32
    %c0_i32_1 = arith.constant 0 : i32
    return %c0_i32, %c0_i32_0 : i32, i32
  }
  func.func @transform_12(%arg0: i32) -> (i32, i32) {
    %c0_i32 = arith.constant 0 : i32
    %c0_i32_0 = arith.constant 0 : i32
    %c0_i32_1 = arith.constant 0 : i32
    return %c0_i32, %c0_i32_0 : i32, i32
  }
  func.func @transform_13(%arg0: i32) -> (i32, i32) {
    %c0_i32 = arith.constant 0 : i32
    %c0_i32_0 = arith.constant 0 : i32
    %c0_i32_1 = arith.constant 0 : i32
    return %c0_i32, %c0_i32_0 : i32, i32
  }
  func.func @transform_14(%arg0: i32) -> (i32, i32) {
    %c0_i32 = arith.constant 0 : i32
    %c0_i32_0 = arith.constant 0 : i32
    %c0_i32_1 = arith.constant 0 : i32
    return %c0_i32, %c0_i32_0 : i32, i32
  }
  func.func @transform_15(%arg0: i32) -> (i32, i32) {
    %c0_i32 = arith.constant 0 : i32
    %c0_i32_0 = arith.constant 0 : i32
    %c0_i32_1 = arith.constant 0 : i32
    return %c0_i32, %c0_i32_0 : i32, i32
  }
  func.func @transform_16(%arg0: i32) -> (i32, i32) {
    %c0_i32 = arith.constant 0 : i32
    %c0_i32_0 = arith.constant 0 : i32
    %c0_i32_1 = arith.constant 0 : i32
    return %c0_i32, %c0_i32_0 : i32, i32
  }
  func.func @transform_17(%arg0: i32) -> (i32, i32) {
    %c0_i32 = arith.constant 0 : i32
    %c0_i32_0 = arith.constant 0 : i32
    %c0_i32_1 = arith.constant 0 : i32
    return %c0_i32, %c0_i32_0 : i32, i32
  }
  func.func @transform_18(%arg0: i32) -> (i32, i32) {
    %c0_i32 = arith.constant 0 : i32
    %c0_i32_0 = arith.constant 0 : i32
    %c0_i32_1 = arith.constant 0 : i32
    return %c0_i32, %c0_i32_0 : i32, i32
  }
  func.func @transform_19(%arg0: i32) -> (i32, i32) {
    %c0_i32 = arith.constant 0 : i32
    %c0_i32_0 = arith.constant 0 : i32
    return %arg0, %c0_i32 : i32, i32
  }
}

</mosaic_0001>

<llo_original>
// kernel: tpu_custom_call.1
$region0: #{tpu_custom_call.1}
  #allocation0 [shape = 'u32[]', space=smem, size = 0x4, offset = 0x4, fixed_abs, tag = 'smem constant byte address 0x4 - core index']
  #allocation1 [shape = 'u32[72,128]{1,0:T(1,128)}', space=vmem, size = 0x9000, scoped, tag = 'internal scratch']
  %s0 = inlined_call_operand.hbm [shape: bf16[32,128], index: 0, kind: input, shape index: {}]
  %s1 = inlined_call_operand.hbm [shape: bf16[256,128], index: 1, kind: input, shape index: {}]
  %s2 = inlined_call_operand.vmem [shape: f32[1,128], index: 2, kind: input, shape index: {}]
  %s3 = inlined_call_operand.hbm [shape: bf16[256,128], index: 3, kind: input, shape index: {}]
  %s4 = inlined_call_operand.vmem [shape: f32[1,128], index: 4, kind: input, shape index: {}]
  %s5 = inlined_call_operand.hbm [shape: bf16[128,128], index: 5, kind: input, shape index: {}]
  %s6 = inlined_call_operand.vmem [shape: f32[1,128], index: 6, kind: input, shape index: {}]
  %s7 = inlined_call_operand.hbm [shape: bf16[256,128], index: 7, kind: input, shape index: {}]
  %s8 = inlined_call_operand.vmem [shape: f32[1,128], index: 8, kind: input, shape index: {}]
  %s9 = inlined_call_operand.hbm [shape: bf16[256,128], index: 9, kind: input, shape index: {}]
  %s10 = inlined_call_operand.vmem [shape: f32[1,128], index: 10, kind: input, shape index: {}]
  %s11 = inlined_call_operand.hbm [shape: bf16[256,128], index: 11, kind: input, shape index: {}]
  %s12 = inlined_call_operand.vmem [shape: f32[1,128], index: 12, kind: input, shape index: {}]
  %s13 = inlined_call_operand.hbm [shape: bf16[256,128], index: 13, kind: input, shape index: {}]
  %s14 = inlined_call_operand.vmem [shape: f32[1,128], index: 14, kind: input, shape index: {}]
  %s15 = inlined_call_operand.hbm [shape: bf16[128,128], index: 15, kind: input, shape index: {}]
  %s16 = inlined_call_operand.vmem [shape: f32[1,128], index: 16, kind: input, shape index: {}]
  %s17 = inlined_call_operand.hbm [shape: bf16[128,128], index: 17, kind: input, shape index: {}]
  %s18 = inlined_call_operand.vmem [shape: f32[1,128], index: 18, kind: input, shape index: {}]
  %s19 = inlined_call_operand.hbm [shape: f32[32,128], index: 19, kind: output, shape index: {}]
  %s20 = sld [smem:[#allocation0]]
  $region149: #{tpu_custom_call.1} parent=0
    _
  %s22 = ssub.s32 1, %s20
  %s23 = scalar_select 0, %s22, %s20
  $region1: #{tpu_custom_call.1} parent=0
    #allocation2 [shape = 'u8[8192]{0}', space=vmem, size = 0x2000, scoped, tag = 'input window, operand 0']
    #allocation3 [shape = 's32[2]{0}', space=sflag, size = 0x8, scoped, tag = 'scoped memory for tpu_custom_call.1']
    #allocation4 [shape = 's32[2]{0}', space=sflag, size = 0x8, scoped, tag = 'scoped memory for tpu_custom_call.1']
    #allocation5 [shape = 'u8[65536]{0}', space=vmem, size = 0x10000, scoped, tag = 'input window, operand 1, single buffered']
    #allocation6 [shape = 's32[1]{0}', space=sflag, size = 0x4, scoped, tag = 'scoped memory for tpu_custom_call.1']
    #allocation7 [shape = 'u8[65536]{0}', space=vmem, size = 0x10000, scoped, tag = 'input window, operand 3, single buffered']
    #allocation8 [shape = 'u8[32768]{0}', space=vmem, size = 0x8000, scoped, tag = 'input window, operand 5, single buffered']
    #allocation9 [shape = 's32[1]{0}', space=sflag, size = 0x4, scoped, tag = 'scoped memory for tpu_custom_call.1']
    #allocation10 [shape = 'u8[65536]{0}', space=vmem, size = 0x10000, scoped, tag = 'input window, operand 7, single buffered']
    #allocation11 [shape = 'u8[65536]{0}', space=vmem, size = 0x10000, scoped, tag = 'input window, operand 9, single buffered']
    #allocation12 [shape = 's32[1]{0}', space=sflag, size = 0x4, scoped, tag = 'scoped memory for tpu_custom_call.1']
    #allocation13 [shape = 'u8[65536]{0}', space=vmem, size = 0x10000, scoped, tag = 'input window, operand 11, single buffered']
    #allocation14 [shape = 'u8[65536]{0}', space=vmem, size = 0x10000, scoped, tag = 'input window, operand 13, single buffered']
    #allocation15 [shape = 's32[1]{0}', space=sflag, size = 0x4, scoped, tag = 'scoped memory for tpu_custom_call.1']
    #allocation16 [shape = 'u8[32768]{0}', space=vmem, size = 0x8000, scoped, tag = 'input window, operand 15, single buffered']
    #allocation17 [shape = 'u8[32768]{0}', space=vmem, size = 0x8000, scoped, tag = 'input window, operand 17, single buffered']
    #allocation18 [shape = 's32[1]{0}', space=sflag, size = 0x4, scoped, tag = 'scoped memory for tpu_custom_call.1']
    #allocation19 [shape = 'u8[16384]{0}', space=vmem, size = 0x4000, scoped, tag = 'output window, operand 0']
    %24 = vsyncpa [#allocation3], 0
    %s25 = scalar_lea.sflag [#allocation3], 1
    %26 = vsyncpa %s25, 0
    %27 = vsyncpa [#allocation6], 0
    %28 = vsyncpa [#allocation9], 0
    %29 = vsyncpa [#allocation12], 0
    %30 = vsyncpa [#allocation15], 0
    %31 = vsyncpa [#allocation18], 0
    %32 = vsyncpa [#allocation4], 0
    %s33 = scalar_lea.sflag [#allocation4], 1
    %34 = vsyncpa %s33, 0
    loop: start=0, step=1, limit=4
    $region2: #{tpu_custom_call.1} parent=1 // loop_pre_header
      _
    $region3: #{tpu_custom_call.1} parent=1 // loop_header
      %s36 = sphi 0, %s40
      %p37 = scmp.ge.s32.totalorder %s36, 4
      %s46 = sphi 0, %s48
      %s49 = sphi 0, %s46
      %s50 = sphi 0, %s49
      %s66 = sphi 0, %s50
      %s70 = sphi 0, %s70
      %s72 = sphi 0, %s70
      %s73 = sphi 0, %s72
      %s87 = sphi 0, %s73
      %s91 = sphi 0, %s91
      %s93 = sphi 0, %s91
      %s94 = sphi 0, %s93
      %s108 = sphi 0, %s94
      %s112 = sphi 0, %s112
      %s114 = sphi 0, %s112
      %s115 = sphi 0, %s114
      %s129 = sphi 0, %s115
      %s133 = sphi 0, %s133
      %s135 = sphi 0, %s133
      %s136 = sphi 0, %s135
      %s150 = sphi 0, %s136
      %s154 = sphi 0, %s154
      %s156 = sphi 0, %s154
      %s157 = sphi 0, %s156
      %s171 = sphi 0, %s157
      %s175 = sphi 0, %s175
      %s177 = sphi 0, %s175
      %s178 = sphi 0, %s177
      %s192 = sphi 0, %s178
      %s196 = sphi 0, %s196
      %s198 = sphi 0, %s196
      %s199 = sphi 0, %s198
      %s213 = sphi 0, %s199
      %s217 = sphi 0, %s217
      %s219 = sphi 0, %s217
      %s220 = sphi 0, %s219
      %s234 = sphi 0, %s220
      %s238 = sphi 0, %s238
      %s240 = sphi 0, %s238
      %s241 = sphi 0, %s240
      %s255 = sphi 0, %s241
      %s259 = sphi 0, %s259
      %s261 = sphi 0, %s259
      %s262 = sphi 0, %s261
      %s276 = sphi 0, %s262
      %s280 = sphi 0, %s280
      %s282 = sphi 0, %s280
      %s283 = sphi 0, %s282
      %s297 = sphi 0, %s283
      %s301 = sphi 0, %s301
      %s303 = sphi 0, %s301
      %s304 = sphi 0, %s303
      %s318 = sphi 0, %s304
      %s322 = sphi 0, %s322
      %s324 = sphi 0, %s322
      %s325 = sphi 0, %s324
      %s339 = sphi 0, %s325
      %s343 = sphi 0, %s343
      %s345 = sphi 0, %s343
      %s346 = sphi 0, %s345
      %s360 = sphi 0, %s346
      %s364 = sphi 0, %s364
      %s366 = sphi 0, %s364
      %s367 = sphi 0, %s366
      %s381 = sphi 0, %s367
      %s385 = sphi 0, %s385
      %s387 = sphi 0, %s385
      %s388 = sphi 0, %s387
      %s402 = sphi 0, %s388
      %s406 = sphi 0, %s406
      %s408 = sphi 0, %s406
      %s409 = sphi 0, %s408
      %s423 = sphi 0, %s409
      %s427 = sphi 0, %s427
      %s429 = sphi 0, %s427
      %s430 = sphi 0, %s429
      %s444 = sphi 0, %s430
      %s450 = sphi 0, %s452
      %s453 = sphi 0, %s450
      %s454 = sphi 0, %s453
      %s470 = sphi 0, %s454
    $region4: #{tpu_custom_call.1} parent=1 // loop_header_branch
      %39 = sbr.rel (%p37) target = $region8
    $region5: #{tpu_custom_call.1} parent=1 // loop_body
      %s41 = ssub.s32 %s36, 1
      %s42 = ssub.s32 %s36, 2
      %s43 = sadd.s32 %s36, 1
      %s44 = ssub.s32 %s36, %s43
      %p45 = scmp.eq.s32.totalorder %s44, 0
      %s47 = sadd.s32 %s46, 1
      %s48 = scalar_select %p45, %s46, %s47
      %p51 = pneg %p45
      %p52 = scmp.eq.s32.totalorder %s36, 1
      %p53 = por %p51, %p52
      %p54 = scmp.ne.s32.totalorder %s46, %s49
      %p55 = scmp.eq.s32.totalorder %s36, 0
      %p56 = por %p54, %p55
      %p57 = scmp.ne.s32.totalorder %s46, %s49
      %p58 = scmp.eq.s32.totalorder %s41, 1
      %p59 = por %p57, %p58
      %p60 = scmp.ne.s32.totalorder %s49, %s50
      %p61 = scmp.eq.s32.totalorder %s41, 0
      %p62 = por %p60, %p61
      %p63 = scmp.ne.s32.totalorder %s49, %s50
      %p64 = scmp.eq.s32.totalorder %s42, 1
      %p65 = por %p63, %p64
      %p67 = scmp.ne.s32.totalorder %s50, %s66
      %p68 = scmp.eq.s32.totalorder %s42, 0
      %p69 = por %p67, %p68
      %s71 = sadd.s32 %s70, 1
      %p74 = scmp.eq.s32.totalorder %s36, 1
      %p75 = scmp.ne.s32.totalorder %s70, %s72
      %p76 = scmp.eq.s32.totalorder %s36, 0
      %p77 = por %p75, %p76
      %p78 = scmp.ne.s32.totalorder %s70, %s72
      %p79 = scmp.eq.s32.totalorder %s41, 1
      %p80 = por %p78, %p79
      %p81 = scmp.ne.s32.totalorder %s72, %s73
      %p82 = scmp.eq.s32.totalorder %s41, 0
      %p83 = por %p81, %p82
      %p84 = scmp.ne.s32.totalorder %s72, %s73
      %p85 = scmp.eq.s32.totalorder %s42, 1
      %p86 = por %p84, %p85
      %p88 = scmp.ne.s32.totalorder %s73, %s87
      %p89 = scmp.eq.s32.totalorder %s42, 0
      %p90 = por %p88, %p89
      %s92 = sadd.s32 %s91, 1
      %p95 = scmp.eq.s32.totalorder %s36, 1
      %p96 = scmp.ne.s32.totalorder %s91, %s93
      %p97 = scmp.eq.s32.totalorder %s36, 0
      %p98 = por %p96, %p97
      %p99 = scmp.ne.s32.totalorder %s91, %s93
      %p100 = scmp.eq.s32.totalorder %s41, 1
      %p101 = por %p99, %p100
      %p102 = scmp.ne.s32.totalorder %s93, %s94
      %p103 = scmp.eq.s32.totalorder %s41, 0
      %p104 = por %p102, %p103
      %p105 = scmp.ne.s32.totalorder %s93, %s94
      %p106 = scmp.eq.s32.totalorder %s42, 1
      %p107 = por %p105, %p106
      %p109 = scmp.ne.s32.totalorder %s94, %s108
      %p110 = scmp.eq.s32.totalorder %s42, 0
      %p111 = por %p109, %p110
      %s113 = sadd.s32 %s112, 1
      %p116 = scmp.eq.s32.totalorder %s36, 1
      %p117 = scmp.ne.s32.totalorder %s112, %s114
      %p118 = scmp.eq.s32.totalorder %s36, 0
      %p119 = por %p117, %p118
      %p120 = scmp.ne.s32.totalorder %s112, %s114
      %p121 = scmp.eq.s32.totalorder %s41, 1
      %p122 = por %p120, %p121
      %p123 = scmp.ne.s32.totalorder %s114, %s115
      %p124 = scmp.eq.s32.totalorder %s41, 0
      %p125 = por %p123, %p124
      %p126 = scmp.ne.s32.totalorder %s114, %s115
      %p127 = scmp.eq.s32.totalorder %s42, 1
      %p128 = por %p126, %p127
      %p130 = scmp.ne.s32.totalorder %s115, %s129
      %p131 = scmp.eq.s32.totalorder %s42, 0
      %p132 = por %p130, %p131
      %s134 = sadd.s32 %s133, 1
      %p137 = scmp.eq.s32.totalorder %s36, 1
      %p138 = scmp.ne.s32.totalorder %s133, %s135
      %p139 = scmp.eq.s32.totalorder %s36, 0
      %p140 = por %p138, %p139
      %p141 = scmp.ne.s32.totalorder %s133, %s135
      %p142 = scmp.eq.s32.totalorder %s41, 1
      %p143 = por %p141, %p142
      %p144 = scmp.ne.s32.totalorder %s135, %s136
      %p145 = scmp.eq.s32.totalorder %s41, 0
      %p146 = por %p144, %p145
      %p147 = scmp.ne.s32.totalorder %s135, %s136
      %p148 = scmp.eq.s32.totalorder %s42, 1
      %p149 = por %p147, %p148
      %p151 = scmp.ne.s32.totalorder %s136, %s150
      %p152 = scmp.eq.s32.totalorder %s42, 0
      %p153 = por %p151, %p152
      %s155 = sadd.s32 %s154, 1
      %p158 = scmp.eq.s32.totalorder %s36, 1
      %p159 = scmp.ne.s32.totalorder %s154, %s156
      %p160 = scmp.eq.s32.totalorder %s36, 0
      %p161 = por %p159, %p160
      %p162 = scmp.ne.s32.totalorder %s154, %s156
      %p163 = scmp.eq.s32.totalorder %s41, 1
      %p164 = por %p162, %p163
      %p165 = scmp.ne.s32.totalorder %s156, %s157
      %p166 = scmp.eq.s32.totalorder %s41, 0
      %p167 = por %p165, %p166
      %p168 = scmp.ne.s32.totalorder %s156, %s157
      %p169 = scmp.eq.s32.totalorder %s42, 1
      %p170 = por %p168, %p169
      %p172 = scmp.ne.s32.totalorder %s157, %s171
      %p173 = scmp.eq.s32.totalorder %s42, 0
      %p174 = por %p172, %p173
      %s176 = sadd.s32 %s175, 1
      %p179 = scmp.eq.s32.totalorder %s36, 1
      %p180 = scmp.ne.s32.totalorder %s175, %s177
      %p181 = scmp.eq.s32.totalorder %s36, 0
      %p182 = por %p180, %p181
      %p183 = scmp.ne.s32.totalorder %s175, %s177
      %p184 = scmp.eq.s32.totalorder %s41, 1
      %p185 = por %p183, %p184
      %p186 = scmp.ne.s32.totalorder %s177, %s178
      %p187 = scmp.eq.s32.totalorder %s41, 0
      %p188 = por %p186, %p187
      %p189 = scmp.ne.s32.totalorder %s177, %s178
      %p190 = scmp.eq.s32.totalorder %s42, 1
      %p191 = por %p189, %p190
      %p193 = scmp.ne.s32.totalorder %s178, %s192
      %p194 = scmp.eq.s32.totalorder %s42, 0
      %p195 = por %p193, %p194
      %s197 = sadd.s32 %s196, 1
      %p200 = scmp.eq.s32.totalorder %s36, 1
      %p201 = scmp.ne.s32.totalorder %s196, %s198
      %p202 = scmp.eq.s32.totalorder %s36, 0
      %p203 = por %p201, %p202
      %p204 = scmp.ne.s32.totalorder %s196, %s198
      %p205 = scmp.eq.s32.totalorder %s41, 1
      %p206 = por %p204, %p205
      %p207 = scmp.ne.s32.totalorder %s198, %s199
      %p208 = scmp.eq.s32.totalorder %s41, 0
      %p209 = por %p207, %p208
      %p210 = scmp.ne.s32.totalorder %s198, %s199
      %p211 = scmp.eq.s32.totalorder %s42, 1
      %p212 = por %p210, %p211
      %p214 = scmp.ne.s32.totalorder %s199, %s213
      %p215 = scmp.eq.s32.totalorder %s42, 0
      %p216 = por %p214, %p215
      %s218 = sadd.s32 %s217, 1
      %p221 = scmp.eq.s32.totalorder %s36, 1
      %p222 = scmp.ne.s32.totalorder %s217, %s219
      %p223 = scmp.eq.s32.totalorder %s36, 0
      %p224 = por %p222, %p223
      %p225 = scmp.ne.s32.totalorder %s217, %s219
      %p226 = scmp.eq.s32.totalorder %s41, 1
      %p227 = por %p225, %p226
      %p228 = scmp.ne.s32.totalorder %s219, %s220
      %p229 = scmp.eq.s32.totalorder %s41, 0
      %p230 = por %p228, %p229
      %p231 = scmp.ne.s32.totalorder %s219, %s220
      %p232 = scmp.eq.s32.totalorder %s42, 1
      %p233 = por %p231, %p232
      %p235 = scmp.ne.s32.totalorder %s220, %s234
      %p236 = scmp.eq.s32.totalorder %s42, 0
      %p237 = por %p235, %p236
      %s239 = sadd.s32 %s238, 1
      %p242 = scmp.eq.s32.totalorder %s36, 1
      %p243 = scmp.ne.s32.totalorder %s238, %s240
      %p244 = scmp.eq.s32.totalorder %s36, 0
      %p245 = por %p243, %p244
      %p246 = scmp.ne.s32.totalorder %s238, %s240
      %p247 = scmp.eq.s32.totalorder %s41, 1
      %p248 = por %p246, %p247
      %p249 = scmp.ne.s32.totalorder %s240, %s241
      %p250 = scmp.eq.s32.totalorder %s41, 0
      %p251 = por %p249, %p250
      %p252 = scmp.ne.s32.totalorder %s240, %s241
      %p253 = scmp.eq.s32.totalorder %s42, 1
      %p254 = por %p252, %p253
      %p256 = scmp.ne.s32.totalorder %s241, %s255
      %p257 = scmp.eq.s32.totalorder %s42, 0
      %p258 = por %p256, %p257
      %s260 = sadd.s32 %s259, 1
      %p263 = scmp.eq.s32.totalorder %s36, 1
      %p264 = scmp.ne.s32.totalorder %s259, %s261
      %p265 = scmp.eq.s32.totalorder %s36, 0
      %p266 = por %p264, %p265
      %p267 = scmp.ne.s32.totalorder %s259, %s261
      %p268 = scmp.eq.s32.totalorder %s41, 1
      %p269 = por %p267, %p268
      %p270 = scmp.ne.s32.totalorder %s261, %s262
      %p271 = scmp.eq.s32.totalorder %s41, 0
      %p272 = por %p270, %p271
      %p273 = scmp.ne.s32.totalorder %s261, %s262
      %p274 = scmp.eq.s32.totalorder %s42, 1
      %p275 = por %p273, %p274
      %p277 = scmp.ne.s32.totalorder %s262, %s276
      %p278 = scmp.eq.s32.totalorder %s42, 0
      %p279 = por %p277, %p278
      %s281 = sadd.s32 %s280, 1
      %p284 = scmp.eq.s32.totalorder %s36, 1
      %p285 = scmp.ne.s32.totalorder %s280, %s282
      %p286 = scmp.eq.s32.totalorder %s36, 0
      %p287 = por %p285, %p286
      %p288 = scmp.ne.s32.totalorder %s280, %s282
      %p289 = scmp.eq.s32.totalorder %s41, 1
      %p290 = por %p288, %p289
      %p291 = scmp.ne.s32.totalorder %s282, %s283
      %p292 = scmp.eq.s32.totalorder %s41, 0
      %p293 = por %p291, %p292
      %p294 = scmp.ne.s32.totalorder %s282, %s283
      %p295 = scmp.eq.s32.totalorder %s42, 1
      %p296 = por %p294, %p295
      %p298 = scmp.ne.s32.totalorder %s283, %s297
      %p299 = scmp.eq.s32.totalorder %s42, 0
      %p300 = por %p298, %p299
      %s302 = sadd.s32 %s301, 1
      %p305 = scmp.eq.s32.totalorder %s36, 1
      %p306 = scmp.ne.s32.totalorder %s301, %s303
      %p307 = scmp.eq.s32.totalorder %s36, 0
      %p308 = por %p306, %p307
      %p309 = scmp.ne.s32.totalorder %s301, %s303
      %p310 = scmp.eq.s32.totalorder %s41, 1
      %p311 = por %p309, %p310
      %p312 = scmp.ne.s32.totalorder %s303, %s304
      %p313 = scmp.eq.s32.totalorder %s41, 0
      %p314 = por %p312, %p313
      %p315 = scmp.ne.s32.totalorder %s303, %s304
      %p316 = scmp.eq.s32.totalorder %s42, 1
      %p317 = por %p315, %p316
      %p319 = scmp.ne.s32.totalorder %s304, %s318
      %p320 = scmp.eq.s32.totalorder %s42, 0
      %p321 = por %p319, %p320
      %s323 = sadd.s32 %s322, 1
      %p326 = scmp.eq.s32.totalorder %s36, 1
      %p327 = scmp.ne.s32.totalorder %s322, %s324
      %p328 = scmp.eq.s32.totalorder %s36, 0
      %p329 = por %p327, %p328
      %p330 = scmp.ne.s32.totalorder %s322, %s324
      %p331 = scmp.eq.s32.totalorder %s41, 1
      %p332 = por %p330, %p331
      %p333 = scmp.ne.s32.totalorder %s324, %s325
      %p334 = scmp.eq.s32.totalorder %s41, 0
      %p335 = por %p333, %p334
      %p336 = scmp.ne.s32.totalorder %s324, %s325
      %p337 = scmp.eq.s32.totalorder %s42, 1
      %p338 = por %p336, %p337
      %p340 = scmp.ne.s32.totalorder %s325, %s339
      %p341 = scmp.eq.s32.totalorder %s42, 0
      %p342 = por %p340, %p341
      %s344 = sadd.s32 %s343, 1
      %p347 = scmp.eq.s32.totalorder %s36, 1
      %p348 = scmp.ne.s32.totalorder %s343, %s345
      %p349 = scmp.eq.s32.totalorder %s36, 0
      %p350 = por %p348, %p349
      %p351 = scmp.ne.s32.totalorder %s343, %s345
      %p352 = scmp.eq.s32.totalorder %s41, 1
      %p353 = por %p351, %p352
      %p354 = scmp.ne.s32.totalorder %s345, %s346
      %p355 = scmp.eq.s32.totalorder %s41, 0
      %p356 = por %p354, %p355
      %p357 = scmp.ne.s32.totalorder %s345, %s346
      %p358 = scmp.eq.s32.totalorder %s42, 1
      %p359 = por %p357, %p358
      %p361 = scmp.ne.s32.totalorder %s346, %s360
      %p362 = scmp.eq.s32.totalorder %s42, 0
      %p363 = por %p361, %p362
      %s365 = sadd.s32 %s364, 1
      %p368 = scmp.eq.s32.totalorder %s36, 1
      %p369 = scmp.ne.s32.totalorder %s364, %s366
      %p370 = scmp.eq.s32.totalorder %s36, 0
      %p371 = por %p369, %p370
      %p372 = scmp.ne.s32.totalorder %s364, %s366
      %p373 = scmp.eq.s32.totalorder %s41, 1
      %p374 = por %p372, %p373
      %p375 = scmp.ne.s32.totalorder %s366, %s367
      %p376 = scmp.eq.s32.totalorder %s41, 0
      %p377 = por %p375, %p376
      %p378 = scmp.ne.s32.totalorder %s366, %s367
      %p379 = scmp.eq.s32.totalorder %s42, 1
      %p380 = por %p378, %p379
      %p382 = scmp.ne.s32.totalorder %s367, %s381
      %p383 = scmp.eq.s32.totalorder %s42, 0
      %p384 = por %p382, %p383
      %s386 = sadd.s32 %s385, 1
      %p389 = scmp.eq.s32.totalorder %s36, 1
      %p390 = scmp.ne.s32.totalorder %s385, %s387
      %p391 = scmp.eq.s32.totalorder %s36, 0
      %p392 = por %p390, %p391
      %p393 = scmp.ne.s32.totalorder %s385, %s387
      %p394 = scmp.eq.s32.totalorder %s41, 1
      %p395 = por %p393, %p394
      %p396 = scmp.ne.s32.totalorder %s387, %s388
      %p397 = scmp.eq.s32.totalorder %s41, 0
      %p398 = por %p396, %p397
      %p399 = scmp.ne.s32.totalorder %s387, %s388
      %p400 = scmp.eq.s32.totalorder %s42, 1
      %p401 = por %p399, %p400
      %p403 = scmp.ne.s32.totalorder %s388, %s402
      %p404 = scmp.eq.s32.totalorder %s42, 0
      %p405 = por %p403, %p404
      %s407 = sadd.s32 %s406, 1
      %p410 = scmp.eq.s32.totalorder %s36, 1
      %p411 = scmp.ne.s32.totalorder %s406, %s408
      %p412 = scmp.eq.s32.totalorder %s36, 0
      %p413 = por %p411, %p412
      %p414 = scmp.ne.s32.totalorder %s406, %s408
      %p415 = scmp.eq.s32.totalorder %s41, 1
      %p416 = por %p414, %p415
      %p417 = scmp.ne.s32.totalorder %s408, %s409
      %p418 = scmp.eq.s32.totalorder %s41, 0
      %p419 = por %p417, %p418
      %p420 = scmp.ne.s32.totalorder %s408, %s409
      %p421 = scmp.eq.s32.totalorder %s42, 1
      %p422 = por %p420, %p421
      %p424 = scmp.ne.s32.totalorder %s409, %s423
      %p425 = scmp.eq.s32.totalorder %s42, 0
      %p426 = por %p424, %p425
      %s428 = sadd.s32 %s427, 1
      %p431 = scmp.eq.s32.totalorder %s36, 1
      %p432 = scmp.ne.s32.totalorder %s427, %s429
      %p433 = scmp.eq.s32.totalorder %s36, 0
      %p434 = por %p432, %p433
      %p435 = scmp.ne.s32.totalorder %s427, %s429
      %p436 = scmp.eq.s32.totalorder %s41, 1
      %p437 = por %p435, %p436
      %p438 = scmp.ne.s32.totalorder %s429, %s430
      %p439 = scmp.eq.s32.totalorder %s41, 0
      %p440 = por %p438, %p439
      %p441 = scmp.ne.s32.totalorder %s429, %s430
      %p442 = scmp.eq.s32.totalorder %s42, 1
      %p443 = por %p441, %p442
      %p445 = scmp.ne.s32.totalorder %s430, %s444
      %p446 = scmp.eq.s32.totalorder %s42, 0
      %p447 = por %p445, %p446
      %s448 = ssub.s32 %s36, %s43
      %p449 = scmp.eq.s32.totalorder %s448, 0
      %s451 = sadd.s32 %s450, 1
      %s452 = scalar_select %p449, %s450, %s451
      %p455 = pneg %p449
      %p456 = scmp.eq.s32.totalorder %s36, 1
      %p457 = por %p455, %p456
      %p458 = scmp.ne.s32.totalorder %s450, %s453
      %p459 = scmp.eq.s32.totalorder %s36, 0
      %p460 = por %p458, %p459
      %p461 = scmp.ne.s32.totalorder %s450, %s453
      %p462 = scmp.eq.s32.totalorder %s41, 1
      %p463 = por %p461, %p462
      %p464 = scmp.ne.s32.totalorder %s453, %s454
      %p465 = scmp.eq.s32.totalorder %s41, 0
      %p466 = por %p464, %p465
      %p467 = scmp.ne.s32.totalorder %s453, %s454
      %p468 = scmp.eq.s32.totalorder %s42, 1
      %p469 = por %p467, %p468
      %p471 = scmp.ne.s32.totalorder %s454, %s470
      %p472 = scmp.eq.s32.totalorder %s42, 0
      %p473 = por %p471, %p472
      %p474 = scmp.le.s32.totalorder 1, %s36
      %p475 = scmp.lt.s32.totalorder %s36, 3
      %p476 = pnand %p474, %p475
      %p477 = pneg %p476
      // Predicated region
      $region9: #{tpu_custom_call.1} parent=5 // pred_check
        _
      $region10: #{tpu_custom_call.1} parent=5 // pred_check_branch
        %479 = sbr.rel (%p476) target = $region12
      $region11: #{tpu_custom_call.1} parent=5 // pred_region
        %s480 = ssub.s32 %s36, 1
        // Predicated region
        $region13: #{tpu_custom_call.1} parent=11 // pred_check
          %p481 = pneg %p83
        $region14: #{tpu_custom_call.1} parent=11 // pred_check_branch
          %483 = sbr.rel (%p481) target = $region16
        $region15: #{tpu_custom_call.1} parent=11 // pred_region
          %485 = vsyncadd [#allocation6], 0
          %s486 = sshll.u32 %s1, 4
          %s487 = int_to_ptr.hbm [resolvable:$true] %s486
          %s488 = sshll.u32 [#allocation5], 4
          %s489 = int_to_ptr.vmem [resolvable:$true] %s488
          %494 = dma.hbm_to_vmem [thread:$0]  %s487, 2048, %s489, [#allocation6], 64, 64, 4
        $region16: #{tpu_custom_call.1} parent=11 // pred_fallthru
          _
        // Predicated region
        $region17: #{tpu_custom_call.1} parent=11 // pred_check
          %p495 = pneg %p104
        $region18: #{tpu_custom_call.1} parent=11 // pred_check_branch
          %497 = sbr.rel (%p495) target = $region20
        $region19: #{tpu_custom_call.1} parent=11 // pred_region
          _
        $region20: #{tpu_custom_call.1} parent=11 // pred_fallthru
          _
        // Predicated region
        $region21: #{tpu_custom_call.1} parent=11 // pred_check
          %p498 = pneg %p125
        $region22: #{tpu_custom_call.1} parent=11 // pred_check_branch
          %500 = sbr.rel (%p498) target = $region24
        $region23: #{tpu_custom_call.1} parent=11 // pred_region
          %502 = vsyncadd [#allocation6], 0
          %s503 = sshll.u32 %s3, 4
          %s504 = int_to_ptr.hbm [resolvable:$true] %s503
          %s505 = sshll.u32 [#allocation7], 4
          %s506 = int_to_ptr.vmem [resolvable:$true] %s505
          %511 = dma.hbm_to_vmem [thread:$0]  %s504, 2048, %s506, [#allocation6], 64, 64, 4
        $region24: #{tpu_custom_call.1} parent=11 // pred_fallthru
          _
        // Predicated region
        $region25: #{tpu_custom_call.1} parent=11 // pred_check
          %p512 = pneg %p146
        $region26: #{tpu_custom_call.1} parent=11 // pred_check_branch
          %514 = sbr.rel (%p512) target = $region28
        $region27: #{tpu_custom_call.1} parent=11 // pred_region
          _
        $region28: #{tpu_custom_call.1} parent=11 // pred_fallthru
          _
        // Predicated region
        $region29: #{tpu_custom_call.1} parent=11 // pred_check
          %p515 = pneg %p167
        $region30: #{tpu_custom_call.1} parent=11 // pred_check_branch
          %517 = sbr.rel (%p515) target = $region32
        $region31: #{tpu_custom_call.1} parent=11 // pred_region
          %519 = vsyncadd [#allocation9], 0
          %s520 = sshll.u32 %s5, 4
          %s521 = int_to_ptr.hbm [resolvable:$true] %s520
          %s522 = sshll.u32 [#allocation8], 4
          %s523 = int_to_ptr.vmem [resolvable:$true] %s522
          %528 = dma.hbm_to_vmem [thread:$0]  %s521, 1024, %s523, [#allocation9], 64, 64, 4
        $region32: #{tpu_custom_call.1} parent=11 // pred_fallthru
          _
        // Predicated region
        $region33: #{tpu_custom_call.1} parent=11 // pred_check
          %p529 = pneg %p188
        $region34: #{tpu_custom_call.1} parent=11 // pred_check_branch
          %531 = sbr.rel (%p529) target = $region36
        $region35: #{tpu_custom_call.1} parent=11 // pred_region
          _
        $region36: #{tpu_custom_call.1} parent=11 // pred_fallthru
          _
        // Predicated region
        $region37: #{tpu_custom_call.1} parent=11 // pred_check
          %p532 = pneg %p209
        $region38: #{tpu_custom_call.1} parent=11 // pred_check_branch
          %534 = sbr.rel (%p532) target = $region40
        $region39: #{tpu_custom_call.1} parent=11 // pred_region
          %536 = vsyncadd [#allocation9], 0
          %s537 = sshll.u32 %s7, 4
          %s538 = int_to_ptr.hbm [resolvable:$true] %s537
          %s539 = sshll.u32 [#allocation10], 4
          %s540 = int_to_ptr.vmem [resolvable:$true] %s539
          %545 = dma.hbm_to_vmem [thread:$0]  %s538, 2048, %s540, [#allocation9], 64, 64, 4
        $region40: #{tpu_custom_call.1} parent=11 // pred_fallthru
          _
        // Predicated region
        $region41: #{tpu_custom_call.1} parent=11 // pred_check
          %p546 = pneg %p230
        $region42: #{tpu_custom_call.1} parent=11 // pred_check_branch
          %548 = sbr.rel (%p546) target = $region44
        $region43: #{tpu_custom_call.1} parent=11 // pred_region
          _
        $region44: #{tpu_custom_call.1} parent=11 // pred_fallthru
          _
        // Predicated region
        $region45: #{tpu_custom_call.1} parent=11 // pred_check
          %p549 = pneg %p251
        $region46: #{tpu_custom_call.1} parent=11 // pred_check_branch
          %551 = sbr.rel (%p549) target = $region48
        $region47: #{tpu_custom_call.1} parent=11 // pred_region
          %553 = vsyncadd [#allocation12], 0
          %s554 = sshll.u32 %s9, 4
          %s555 = int_to_ptr.hbm [resolvable:$true] %s554
          %s556 = sshll.u32 [#allocation11], 4
          %s557 = int_to_ptr.vmem [resolvable:$true] %s556
          %562 = dma.hbm_to_vmem [thread:$0]  %s555, 2048, %s557, [#allocation12], 64, 64, 4
        $region48: #{tpu_custom_call.1} parent=11 // pred_fallthru
          _
        // Predicated region
        $region49: #{tpu_custom_call.1} parent=11 // pred_check
          %p563 = pneg %p272
        $region50: #{tpu_custom_call.1} parent=11 // pred_check_branch
          %565 = sbr.rel (%p563) target = $region52
        $region51: #{tpu_custom_call.1} parent=11 // pred_region
          _
        $region52: #{tpu_custom_call.1} parent=11 // pred_fallthru
          _
        // Predicated region
        $region53: #{tpu_custom_call.1} parent=11 // pred_check
          %p566 = pneg %p293
        $region54: #{tpu_custom_call.1} parent=11 // pred_check_branch
          %568 = sbr.rel (%p566) target = $region56
        $region55: #{tpu_custom_call.1} parent=11 // pred_region
          %570 = vsyncadd [#allocation12], 0
          %s571 = sshll.u32 %s11, 4
          %s572 = int_to_ptr.hbm [resolvable:$true] %s571
          %s573 = sshll.u32 [#allocation13], 4
          %s574 = int_to_ptr.vmem [resolvable:$true] %s573
          %579 = dma.hbm_to_vmem [thread:$0]  %s572, 2048, %s574, [#allocation12], 64, 64, 4
        $region56: #{tpu_custom_call.1} parent=11 // pred_fallthru
          _
        // Predicated region
        $region57: #{tpu_custom_call.1} parent=11 // pred_check
          %p580 = pneg %p314
        $region58: #{tpu_custom_call.1} parent=11 // pred_check_branch
          %582 = sbr.rel (%p580) target = $region60
        $region59: #{tpu_custom_call.1} parent=11 // pred_region
          _
        $region60: #{tpu_custom_call.1} parent=11 // pred_fallthru
          _
        // Predicated region
        $region61: #{tpu_custom_call.1} parent=11 // pred_check
          %p583 = pneg %p335
        $region62: #{tpu_custom_call.1} parent=11 // pred_check_branch
          %585 = sbr.rel (%p583) target = $region64
        $region63: #{tpu_custom_call.1} parent=11 // pred_region
          %587 = vsyncadd [#allocation15], 0
          %s588 = sshll.u32 %s13, 4
          %s589 = int_to_ptr.hbm [resolvable:$true] %s588
          %s590 = sshll.u32 [#allocation14], 4
          %s591 = int_to_ptr.vmem [resolvable:$true] %s590
          %596 = dma.hbm_to_vmem [thread:$0]  %s589, 2048, %s591, [#allocation15], 64, 64, 4
        $region64: #{tpu_custom_call.1} parent=11 // pred_fallthru
          _
        // Predicated region
        $region65: #{tpu_custom_call.1} parent=11 // pred_check
          %p597 = pneg %p356
        $region66: #{tpu_custom_call.1} parent=11 // pred_check_branch
          %599 = sbr.rel (%p597) target = $region68
        $region67: #{tpu_custom_call.1} parent=11 // pred_region
          _
        $region68: #{tpu_custom_call.1} parent=11 // pred_fallthru
          _
        // Predicated region
        $region69: #{tpu_custom_call.1} parent=11 // pred_check
          %p600 = pneg %p377
        $region70: #{tpu_custom_call.1} parent=11 // pred_check_branch
          %602 = sbr.rel (%p600) target = $region72
        $region71: #{tpu_custom_call.1} parent=11 // pred_region
          %604 = vsyncadd [#allocation15], 0
          %s605 = sshll.u32 %s15, 4
          %s606 = int_to_ptr.hbm [resolvable:$true] %s605
          %s607 = sshll.u32 [#allocation16], 4
          %s608 = int_to_ptr.vmem [resolvable:$true] %s607
          %613 = dma.hbm_to_vmem [thread:$0]  %s606, 1024, %s608, [#allocation15], 64, 64, 4
        $region72: #{tpu_custom_call.1} parent=11 // pred_fallthru
          _
        // Predicated region
        $region73: #{tpu_custom_call.1} parent=11 // pred_check
          %p614 = pneg %p398
        $region74: #{tpu_custom_call.1} parent=11 // pred_check_branch
          %616 = sbr.rel (%p614) target = $region76
        $region75: #{tpu_custom_call.1} parent=11 // pred_region
          _
        $region76: #{tpu_custom_call.1} parent=11 // pred_fallthru
          _
        // Predicated region
        $region77: #{tpu_custom_call.1} parent=11 // pred_check
          %p617 = pneg %p419
        $region78: #{tpu_custom_call.1} parent=11 // pred_check_branch
          %619 = sbr.rel (%p617) target = $region80
        $region79: #{tpu_custom_call.1} parent=11 // pred_region
          %621 = vsyncadd [#allocation18], 0
          %s622 = sshll.u32 %s17, 4
          %s623 = int_to_ptr.hbm [resolvable:$true] %s622
          %s624 = sshll.u32 [#allocation17], 4
          %s625 = int_to_ptr.vmem [resolvable:$true] %s624
          %630 = dma.hbm_to_vmem [thread:$0]  %s623, 1024, %s625, [#allocation18], 64, 64, 4
        $region80: #{tpu_custom_call.1} parent=11 // pred_fallthru
          _
        // Predicated region
        $region81: #{tpu_custom_call.1} parent=11 // pred_check
          %p631 = pneg %p440
        $region82: #{tpu_custom_call.1} parent=11 // pred_check_branch
          %633 = sbr.rel (%p631) target = $region84
        $region83: #{tpu_custom_call.1} parent=11 // pred_region
          _
        $region84: #{tpu_custom_call.1} parent=11 // pred_fallthru
          _
      $region12: #{tpu_custom_call.1} parent=5 // pred_fallthru
        _
      %p634 = scmp.lt.s32.totalorder %s36, 2
      // Predicated region
      $region85: #{tpu_custom_call.1} parent=5 // pred_check
        %p635 = pneg %p634
      $region86: #{tpu_custom_call.1} parent=5 // pred_check_branch
        %637 = sbr.rel (%p635) target = $region88
      $region87: #{tpu_custom_call.1} parent=5 // pred_region
        // Predicated region
        $region89: #{tpu_custom_call.1} parent=87 // pred_check
          %p638 = pneg %p56
        $region90: #{tpu_custom_call.1} parent=87 // pred_check_branch
          %640 = sbr.rel (%p638) target = $region92
        $region91: #{tpu_custom_call.1} parent=87 // pred_region
          %s641 = sand.u32 %s46, 1
          %s642 = scalar_lea.sflag [#allocation3], %s641
          %s643 = sand.u32 %s46, 1
          %s644 = smul.addr %s643, 8
          %s645 = scalar_lea.vmem [#allocation2], %s644
          %s646 = smul.u32 2, %s36
          %648 = vsyncadd %s642, 0
          %s649 = smul.addr %s646, 4
          %s650 = scalar_lea.hbm %s0, %s649
          %s651 = sshll.u32 %s650, 4
          %s652 = int_to_ptr.hbm [resolvable:$true] %s651
          %s653 = sshll.u32 %s645, 4
          %s654 = int_to_ptr.vmem [resolvable:$true] %s653
          %659 = dma.hbm_to_vmem [thread:$0]  %s652, 128, %s654, %s642, 64, 64, 4
        $region92: #{tpu_custom_call.1} parent=87 // pred_fallthru
          _
      $region88: #{tpu_custom_call.1} parent=5 // pred_fallthru
        _
      %p660 = scmp.le.s32.totalorder 1, %s36
      %p661 = scmp.lt.s32.totalorder %s36, 3
      %p662 = pnand %p660, %p661
      %p663 = pneg %p662
      // Predicated region
      $region93: #{tpu_custom_call.1} parent=5 // pred_check
        _
      $region94: #{tpu_custom_call.1} parent=5 // pred_check_branch
        %665 = sbr.rel (%p662) target = $region96
      $region95: #{tpu_custom_call.1} parent=5 // pred_region
        %s666 = ssub.s32 %s36, 1
        %s667 = sand.u32 %s49, 1
        %s668 = scalar_lea.sflag [#allocation3], %s667
        %s669 = sand.u32 %s49, 1
        %s670 = smul.addr %s669, 8
        %s671 = scalar_lea.vmem [#allocation2], %s670
        // Predicated region
        $region97: #{tpu_custom_call.1} parent=95 // pred_check
          %p672 = pneg %p62
        $region98: #{tpu_custom_call.1} parent=95 // pred_check_branch
          %674 = sbr.rel (%p672) target = $region100
        $region99: #{tpu_custom_call.1} parent=95 // pred_region
          %676 = dma.done %s668, 128
        $region100: #{tpu_custom_call.1} parent=95 // pred_fallthru
          _
        // Predicated region
        $region101: #{tpu_custom_call.1} parent=95 // pred_check
          %p677 = pneg %p83
        $region102: #{tpu_custom_call.1} parent=95 // pred_check_branch
          %679 = sbr.rel (%p677) target = $region104
        $region103: #{tpu_custom_call.1} parent=95 // pred_region
          %681 = dma.done [#allocation6], 2048
        $region104: #{tpu_custom_call.1} parent=95 // pred_fallthru
          _
        // Predicated region
        $region105: #{tpu_custom_call.1} parent=95 // pred_check
          %p682 = pneg %p125
        $region106: #{tpu_custom_call.1} parent=95 // pred_check_branch
          %684 = sbr.rel (%p682) target = $region108
        $region107: #{tpu_custom_call.1} parent=95 // pred_region
          %686 = dma.done [#allocation6], 2048
        $region108: #{tpu_custom_call.1} parent=95 // pred_fallthru
          _
        // Predicated region
        $region109: #{tpu_custom_call.1} parent=95 // pred_check
          %p687 = pneg %p167
        $region110: #{tpu_custom_call.1} parent=95 // pred_check_branch
          %689 = sbr.rel (%p687) target = $region112
        $region111: #{tpu_custom_call.1} parent=95 // pred_region
          %691 = dma.done [#allocation9], 1024
        $region112: #{tpu_custom_call.1} parent=95 // pred_fallthru
          _
        // Predicated region
        $region113: #{tpu_custom_call.1} parent=95 // pred_check
          %p692 = pneg %p209
        $region114: #{tpu_custom_call.1} parent=95 // pred_check_branch
          %694 = sbr.rel (%p692) target = $region116
        $region115: #{tpu_custom_call.1} parent=95 // pred_region
          %696 = dma.done [#allocation9], 2048
        $region116: #{tpu_custom_call.1} parent=95 // pred_fallthru
          _
        // Predicated region
        $region117: #{tpu_custom_call.1} parent=95 // pred_check
          %p697 = pneg %p251
        $region118: #{tpu_custom_call.1} parent=95 // pred_check_branch
          %699 = sbr.rel (%p697) target = $region120
        $region119: #{tpu_custom_call.1} parent=95 // pred_region
          %701 = dma.done [#allocation12], 2048
        $region120: #{tpu_custom_call.1} parent=95 // pred_fallthru
          _
        // Predicated region
        $region121: #{tpu_custom_call.1} parent=95 // pred_check
          %p702 = pneg %p293
        $region122: #{tpu_custom_call.1} parent=95 // pred_check_branch
          %704 = sbr.rel (%p702) target = $region124
        $region123: #{tpu_custom_call.1} parent=95 // pred_region
          %706 = dma.done [#allocation12], 2048
        $region124: #{tpu_custom_call.1} parent=95 // pred_fallthru
          _
        // Predicated region
        $region125: #{tpu_custom_call.1} parent=95 // pred_check
          %p707 = pneg %p335
        $region126: #{tpu_custom_call.1} parent=95 // pred_check_branch
          %709 = sbr.rel (%p707) target = $region128
        $region127: #{tpu_custom_call.1} parent=95 // pred_region
          %711 = dma.done [#allocation15], 2048
        $region128: #{tpu_custom_call.1} parent=95 // pred_fallthru
          _
        // Predicated region
        $region129: #{tpu_custom_call.1} parent=95 // pred_check
          %p712 = pneg %p377
        $region130: #{tpu_custom_call.1} parent=95 // pred_check_branch
          %714 = sbr.rel (%p712) target = $region132
        $region131: #{tpu_custom_call.1} parent=95 // pred_region
          %716 = dma.done [#allocation15], 1024
        $region132: #{tpu_custom_call.1} parent=95 // pred_fallthru
          _
        // Predicated region
        $region133: #{tpu_custom_call.1} parent=95 // pred_check
          %p717 = pneg %p419
        $region134: #{tpu_custom_call.1} parent=95 // pred_check_branch
          %719 = sbr.rel (%p717) target = $region136
        $region135: #{tpu_custom_call.1} parent=95 // pred_region
          %721 = dma.done [#allocation18], 1024
        $region136: #{tpu_custom_call.1} parent=95 // pred_fallthru
          _
        %s722 = sand.u32 %s49, 1
        %s723 = scalar_lea.sflag [#allocation3], %s722
        %s724 = sand.u32 %s49, 1
        %s725 = smul.addr %s724, 8
        %s726 = scalar_lea.vmem [#allocation2], %s725
        %p727 = pneg %p62
        %p728 = pneg %p59
        %p729 = pneg %p83
        %p730 = pneg %p80
        %p731 = pneg %p104
        %p732 = pneg %p101
        %p733 = pneg %p125
        %p734 = pneg %p122
        %p735 = pneg %p146
        %p736 = pneg %p143
        %p737 = pneg %p167
        %p738 = pneg %p164
        %p739 = pneg %p188
        %p740 = pneg %p185
        %p741 = pneg %p209
        %p742 = pneg %p206
        %p743 = pneg %p230
        %p744 = pneg %p227
        %p745 = pneg %p251
        %p746 = pneg %p248
        %p747 = pneg %p272
        %p748 = pneg %p269
        %p749 = pneg %p293
        %p750 = pneg %p290
        %p751 = pneg %p314
        %p752 = pneg %p311
        %p753 = pneg %p335
        %p754 = pneg %p332
        %p755 = pneg %p356
        %p756 = pneg %p353
        %p757 = pneg %p377
        %p758 = pneg %p374
        %p759 = pneg %p398
        %p760 = pneg %p395
        %p761 = pneg %p419
        %p762 = pneg %p416
        %p763 = pneg %p440
        %p764 = pneg %p437
        %p765 = pneg %p466
        %p766 = pneg %p463
        %s767 = sand.u32 %s453, 1
        %s768 = scalar_lea.sflag [#allocation4], %s767
        %s769 = sand.u32 %s453, 1
        %s770 = smul.addr %s769, 16
        %s771 = scalar_lea.vmem [#allocation19], %s770
        %s772 = smul.u32 2, %s41
        %s773 = smul.u32 2, %s41
        %v774 = vlaneseq
        %v775 = vshrl.u32 %v774, 7
        %v776 = vadd.s32 %v775, 8
        %vm777 = vcmp.lt.s32.totalorder %v775, 0
        %v778 = vsub.s32 0, %v775
        %v779 = vsel %vm777, %v778, %v775
        %v780 = vshrl.u32 %v779, 4
        %v781 = vand.u32 %v779, 15
        %v782 = vsub.s32 0, %v781
        %v783 = vsel %vm777, %v782, %v781
        %vm784 = vcmp.lt.s32.totalorder %v776, 0
        %v785 = vsub.s32 0, %v776
        %v786 = vsel %vm784, %v785, %v776
        %v787 = vshrl.u32 %v786, 4
        %v788 = vand.u32 %v786, 15
        %v789 = vsub.s32 0, %v788
        %v790 = vsel %vm784, %v789, %v788
        %vm791 = vcmp.ne.s32.totalorder %v783, 0
        %vm792 = vcmp.ne.s32.totalorder %v790, 0
        %vm793 = vcmp.lt.s32.totalorder %v783, 0
        %vm794 = vcmp.lt.s32.totalorder %v790, 0
        %vm795 = vmand %vm793, %vm791
        %vm796 = vmand %vm794, %vm792
        %v797 = vadd.s32 %v783, 16
        %v798 = vadd.s32 %v790, 16
        %v799 = vsel %vm795, %v797, %v783
        %v800 = vsel %vm796, %v798, %v790
        %v801 = vld [vmem:[%s671] sm:$0xf]
        %v802 = vld [vmem:[%s671 + $0x4] sm:$0xf]
        %v803 = vunpack.c.l.bf16 %v801
        %v804 = vunpack.c.l.bf16 %v802
        %v805 = vrot.slane %v803, 7
        %v806 = vrot.slane %v804, 7
        %vm807 = vcmp.lt.s32.totalorder %v775, 1
        %v808 = vsel %vm807, %v805, %v806
        %v809 = vsel %vm807, %v806, %v805
        %vm810 = vcmp.ge.s32.totalorder %v799, 1
        %vm811 = vcmp.ge.s32.totalorder %v800, 1
        %v812 = vsel %vm810, %v809, 0.0
        %v813 = vsel %vm811, %v808, 0.0
        %v814 = vpack.c.bf16 %v813, %v812
        %v815 = vld [vmem:[#allocation5] sm:$0xf]
        %v816 = vld [vmem:[#allocation5 + $0x4] sm:$0xf]
        %v817 = vld [vmem:[#allocation5 + $0x8] sm:$0xf]
        %v818 = vld [vmem:[#allocation5 + $0xc] sm:$0xf]
        %v819 = vld [vmem:[#allocation5 + $0x10] sm:$0xf]
        %v820 = vld [vmem:[#allocation5 + $0x14] sm:$0xf]
        %v821 = vld [vmem:[#allocation5 + $0x18] sm:$0xf]
        %v822 = vld [vmem:[#allocation5 + $0x1c] sm:$0xf]
        %v823 = vld [vmem:[#allocation5 + $0x20] sm:$0xf]
        %v824 = vld [vmem:[#allocation5 + $0x24] sm:$0xf]
        %v825 = vld [vmem:[#allocation5 + $0x28] sm:$0xf]
        %v826 = vld [vmem:[#allocation5 + $0x2c] sm:$0xf]
        %v827 = vld [vmem:[#allocation5 + $0x30] sm:$0xf]
        %v828 = vld [vmem:[#allocation5 + $0x34] sm:$0xf]
        %v829 = vld [vmem:[#allocation5 + $0x38] sm:$0xf]
        %v830 = vld [vmem:[#allocation5 + $0x3c] sm:$0xf]
        %v831 = vld [vmem:[#allocation5 + $0x40] sm:$0xf]
        %v832 = vld [vmem:[#allocation5 + $0x44] sm:$0xf]
        %v833 = vld [vmem:[#allocation5 + $0x48] sm:$0xf]
        %v834 = vld [vmem:[#allocation5 + $0x4c] sm:$0xf]
        %v835 = vld [vmem:[#allocation5 + $0x50] sm:$0xf]
        %v836 = vld [vmem:[#allocation5 + $0x54] sm:$0xf]
        %v837 = vld [vmem:[#allocation5 + $0x58] sm:$0xf]
        %v838 = vld [vmem:[#allocation5 + $0x5c] sm:$0xf]
        %v839 = vld [vmem:[#allocation5 + $0x60] sm:$0xf]
        %v840 = vld [vmem:[#allocation5 + $0x64] sm:$0xf]
        %v841 = vld [vmem:[#allocation5 + $0x68] sm:$0xf]
        %v842 = vld [vmem:[#allocation5 + $0x6c] sm:$0xf]
        %v843 = vld [vmem:[#allocation5 + $0x70] sm:$0xf]
        %v844 = vld [vmem:[#allocation5 + $0x74] sm:$0xf]
        %v845 = vld [vmem:[#allocation5 + $0x78] sm:$0xf]
        %v846 = vld [vmem:[#allocation5 + $0x7c] sm:$0xf]
        %v849 = vunpack.c.l.b16 %v801
        %v850 = vunpack.c.l.b16 %v802
        %v851 = vpack.c.b16 %v850, %v849
        %v869 = vunpack.c.l.b16 %v831
        %v870 = vunpack.c.l.b16 %v832
        %v871 = vunpack.c.l.b16 %v833
        %v872 = vunpack.c.l.b16 %v834
        %v873 = vunpack.c.l.b16 %v835
        %v874 = vunpack.c.l.b16 %v836
        %v875 = vunpack.c.l.b16 %v837
        %v876 = vunpack.c.l.b16 %v838
        %v877 = vunpack.c.l.b16 %v839
        %v878 = vunpack.c.l.b16 %v840
        %v879 = vunpack.c.l.b16 %v841
        %v880 = vunpack.c.l.b16 %v842
        %v881 = vunpack.c.l.b16 %v843
        %v882 = vunpack.c.l.b16 %v844
        %v883 = vunpack.c.l.b16 %v845
        %v884 = vunpack.c.l.b16 %v846
        %v885 = vpack.c.b16 %v870, %v869
        %v886 = vpack.c.b16 %v872, %v871
        %v887 = vpack.c.b16 %v874, %v873
        %v888 = vpack.c.b16 %v876, %v875
        %v889 = vpack.c.b16 %v878, %v877
        %v890 = vpack.c.b16 %v880, %v879
        %v891 = vpack.c.b16 %v882, %v881
        %v892 = vpack.c.b16 %v884, %v883
        %901 = vmatpush.bf16.msra.mxu0 %v892
        %902 = vmatpush.bf16.msra.mxu0 %v891
        %903 = vmatpush.bf16.msra.mxu0 %v890
        %904 = vmatpush.bf16.msra.mxu0 %v889
        %905 = vmatpush.bf16.msra.mxu0 %v888
        %906 = vmatpush.bf16.msra.mxu0 %v887
        %907 = vmatpush.bf16.msra.mxu0 %v886
        %908 = vmatpush.bf16.msra.mxu0 %v885
        %909 = vmatmul.bf16.gmra.mxu0 %v851
        %v910 = vpop.f32.mrf.mxu0
        %v911 = vadd.f32 0.0, %v910
        %v912 = vpop.f32.mrf.mxu0
        %v913 = vadd.f32 0.0, %v912
        %914 = vdwg.mxu0
        %v931 = vunpack.c.l.b16 %v815
        %v932 = vunpack.c.l.b16 %v816
        %v933 = vunpack.c.l.b16 %v817
        %v934 = vunpack.c.l.b16 %v818
        %v935 = vunpack.c.l.b16 %v819
        %v936 = vunpack.c.l.b16 %v820
        %v937 = vunpack.c.l.b16 %v821
        %v938 = vunpack.c.l.b16 %v822
        %v939 = vunpack.c.l.b16 %v823
        %v940 = vunpack.c.l.b16 %v824
        %v941 = vunpack.c.l.b16 %v825
        %v942 = vunpack.c.l.b16 %v826
        %v943 = vunpack.c.l.b16 %v827
        %v944 = vunpack.c.l.b16 %v828
        %v945 = vunpack.c.l.b16 %v829
        %v946 = vunpack.c.l.b16 %v830
        %v947 = vpack.c.b16 %v932, %v931
        %v948 = vpack.c.b16 %v934, %v933
        %v949 = vpack.c.b16 %v936, %v935
        %v950 = vpack.c.b16 %v938, %v937
        %v951 = vpack.c.b16 %v940, %v939
        %v952 = vpack.c.b16 %v942, %v941
        %v953 = vpack.c.b16 %v944, %v943
        %v954 = vpack.c.b16 %v946, %v945
        %963 = vmatpush.bf16.msra.mxu0 %v954
        %964 = vmatpush.bf16.msra.mxu0 %v953
        %965 = vmatpush.bf16.msra.mxu0 %v952
        %966 = vmatpush.bf16.msra.mxu0 %v951
        %967 = vmatpush.bf16.msra.mxu0 %v950
        %968 = vmatpush.bf16.msra.mxu0 %v949
        %969 = vmatpush.bf16.msra.mxu0 %v948
        %970 = vmatpush.bf16.msra.mxu0 %v947
        %971 = vmatmul.bf16.gmra.mxu0 %v814
        %v972 = vpop.f32.mrf.mxu0
        %v973 = vadd.f32 %v911, %v972
        %v974 = vpop.f32.mrf.mxu0
        %v975 = vadd.f32 %v913, %v974
        %976 = vdwg.mxu0
        %v977 = vld [vmem:[%s2] sm:$0x1]
        %v979 = vperm.slane %v977, 0
        %v981 = vadd.f32 %v973, %v979
        %v982 = vadd.f32 %v975, %v979
        %v983 = vmax.f32 %v981, 0.0
        %v984 = vmax.f32 %v982, 0.0
        %v985 = vrot.slane %v983, 7
        %v986 = vrot.slane %v984, 7
        %v987 = vsel %vm807, %v985, %v986
        %v988 = vsel %vm807, %v986, %v985
        %v989 = vsel %vm810, %v988, 0.0
        %v990 = vsel %vm811, %v987, 0.0
        %v991 = vpack.c.bf16 %v990, %v989
        %v992 = vld [vmem:[#allocation7] sm:$0xf]
        %v993 = vld [vmem:[#allocation7 + $0x4] sm:$0xf]
        %v994 = vld [vmem:[#allocation7 + $0x8] sm:$0xf]
        %v995 = vld [vmem:[#allocation7 + $0xc] sm:$0xf]
        %v996 = vld [vmem:[#allocation7 + $0x10] sm:$0xf]
        %v997 = vld [vmem:[#allocation7 + $0x14] sm:$0xf]
        %v998 = vld [vmem:[#allocation7 + $0x18] sm:$0xf]
        %v999 = vld [vmem:[#allocation7 + $0x1c] sm:$0xf]
        %v1000 = vld [vmem:[#allocation7 + $0x20] sm:$0xf]
        %v1001 = vld [vmem:[#allocation7 + $0x24] sm:$0xf]
        %v1002 = vld [vmem:[#allocation7 + $0x28] sm:$0xf]
        %v1003 = vld [vmem:[#allocation7 + $0x2c] sm:$0xf]
        %v1004 = vld [vmem:[#allocation7 + $0x30] sm:$0xf]
        %v1005 = vld [vmem:[#allocation7 + $0x34] sm:$0xf]
        %v1006 = vld [vmem:[#allocation7 + $0x38] sm:$0xf]
        %v1007 = vld [vmem:[#allocation7 + $0x3c] sm:$0xf]
        %v1008 = vpack.c.bf16 %v984, %v983
        %v1009 = vld [vmem:[#allocation7 + $0x40] sm:$0xf]
        %v1010 = vld [vmem:[#allocation7 + $0x44] sm:$0xf]
        %v1011 = vld [vmem:[#allocation7 + $0x48] sm:$0xf]
        %v1012 = vld [vmem:[#allocation7 + $0x4c] sm:$0xf]
        %v1013 = vld [vmem:[#allocation7 + $0x50] sm:$0xf]
        %v1014 = vld [vmem:[#allocation7 + $0x54] sm:$0xf]
        %v1015 = vld [vmem:[#allocation7 + $0x58] sm:$0xf]
        %v1016 = vld [vmem:[#allocation7 + $0x5c] sm:$0xf]
        %v1017 = vld [vmem:[#allocation7 + $0x60] sm:$0xf]
        %v1018 = vld [vmem:[#allocation7 + $0x64] sm:$0xf]
        %v1019 = vld [vmem:[#allocation7 + $0x68] sm:$0xf]
        %v1020 = vld [vmem:[#allocation7 + $0x6c] sm:$0xf]
        %v1021 = vld [vmem:[#allocation7 + $0x70] sm:$0xf]
        %v1022 = vld [vmem:[#allocation7 + $0x74] sm:$0xf]
        %v1023 = vld [vmem:[#allocation7 + $0x78] sm:$0xf]
        %v1024 = vld [vmem:[#allocation7 + $0x7c] sm:$0xf]
        %v1041 = vunpack.c.l.b16 %v1009
        %v1042 = vunpack.c.l.b16 %v1010
        %v1043 = vunpack.c.l.b16 %v1011
        %v1044 = vunpack.c.l.b16 %v1012
        %v1045 = vunpack.c.l.b16 %v1013
        %v1046 = vunpack.c.l.b16 %v1014
        %v1047 = vunpack.c.l.b16 %v1015
        %v1048 = vunpack.c.l.b16 %v1016
        %v1049 = vunpack.c.l.b16 %v1017
        %v1050 = vunpack.c.l.b16 %v1018
        %v1051 = vunpack.c.l.b16 %v1019
        %v1052 = vunpack.c.l.b16 %v1020
        %v1053 = vunpack.c.l.b16 %v1021
        %v1054 = vunpack.c.l.b16 %v1022
        %v1055 = vunpack.c.l.b16 %v1023
        %v1056 = vunpack.c.l.b16 %v1024
        %v1057 = vpack.c.b16 %v1042, %v1041
        %v1058 = vpack.c.b16 %v1044, %v1043
        %v1059 = vpack.c.b16 %v1046, %v1045
        %v1060 = vpack.c.b16 %v1048, %v1047
        %v1061 = vpack.c.b16 %v1050, %v1049
        %v1062 = vpack.c.b16 %v1052, %v1051
        %v1063 = vpack.c.b16 %v1054, %v1053
        %v1064 = vpack.c.b16 %v1056, %v1055
        %1073 = vmatpush.bf16.msra.mxu0 %v1064
        %1074 = vmatpush.bf16.msra.mxu0 %v1063
        %1075 = vmatpush.bf16.msra.mxu0 %v1062
        %1076 = vmatpush.bf16.msra.mxu0 %v1061
        %1077 = vmatpush.bf16.msra.mxu0 %v1060
        %1078 = vmatpush.bf16.msra.mxu0 %v1059
        %1079 = vmatpush.bf16.msra.mxu0 %v1058
        %1080 = vmatpush.bf16.msra.mxu0 %v1057
        %1081 = vmatmul.bf16.gmra.mxu0 %v1008
        %v1082 = vpop.f32.mrf.mxu0
        %v1083 = vadd.f32 0.0, %v1082
        %v1084 = vpop.f32.mrf.mxu0
        %v1085 = vadd.f32 0.0, %v1084
        %1086 = vdwg.mxu0
        %v1103 = vunpack.c.l.b16 %v992
        %v1104 = vunpack.c.l.b16 %v993
        %v1105 = vunpack.c.l.b16 %v994
        %v1106 = vunpack.c.l.b16 %v995
        %v1107 = vunpack.c.l.b16 %v996
        %v1108 = vunpack.c.l.b16 %v997
        %v1109 = vunpack.c.l.b16 %v998
        %v1110 = vunpack.c.l.b16 %v999
        %v1111 = vunpack.c.l.b16 %v1000
        %v1112 = vunpack.c.l.b16 %v1001
        %v1113 = vunpack.c.l.b16 %v1002
        %v1114 = vunpack.c.l.b16 %v1003
        %v1115 = vunpack.c.l.b16 %v1004
        %v1116 = vunpack.c.l.b16 %v1005
        %v1117 = vunpack.c.l.b16 %v1006
        %v1118 = vunpack.c.l.b16 %v1007
        %v1119 = vpack.c.b16 %v1104, %v1103
        %v1120 = vpack.c.b16 %v1106, %v1105
        %v1121 = vpack.c.b16 %v1108, %v1107
        %v1122 = vpack.c.b16 %v1110, %v1109
        %v1123 = vpack.c.b16 %v1112, %v1111
        %v1124 = vpack.c.b16 %v1114, %v1113
        %v1125 = vpack.c.b16 %v1116, %v1115
        %v1126 = vpack.c.b16 %v1118, %v1117
        %1135 = vmatpush.bf16.msra.mxu0 %v1126
        %1136 = vmatpush.bf16.msra.mxu0 %v1125
        %1137 = vmatpush.bf16.msra.mxu0 %v1124
        %1138 = vmatpush.bf16.msra.mxu0 %v1123
        %1139 = vmatpush.bf16.msra.mxu0 %v1122
        %1140 = vmatpush.bf16.msra.mxu0 %v1121
        %1141 = vmatpush.bf16.msra.mxu0 %v1120
        %1142 = vmatpush.bf16.msra.mxu0 %v1119
        %1143 = vmatmul.bf16.gmra.mxu0 %v991
        %v1144 = vpop.f32.mrf.mxu0
        %v1145 = vadd.f32 %v1083, %v1144
        %v1146 = vpop.f32.mrf.mxu0
        %v1147 = vadd.f32 %v1085, %v1146
        %1148 = vdwg.mxu0
        %v1149 = vld [vmem:[%s4] sm:$0x1]
        %v1151 = vperm.slane %v1149, 0
        %v1153 = vadd.f32 %v1145, %v1151
        %v1154 = vadd.f32 %v1147, %v1151
        %v1155 = vmax.f32 %v1153, 0.0
        %v1156 = vmax.f32 %v1154, 0.0
        %v1157 = vld [vmem:[#allocation8] sm:$0xf]
        %v1158 = vld [vmem:[#allocation8 + $0x4] sm:$0xf]
        %v1159 = vld [vmem:[#allocation8 + $0x8] sm:$0xf]
        %v1160 = vld [vmem:[#allocation8 + $0xc] sm:$0xf]
        %v1161 = vld [vmem:[#allocation8 + $0x10] sm:$0xf]
        %v1162 = vld [vmem:[#allocation8 + $0x14] sm:$0xf]
        %v1163 = vld [vmem:[#allocation8 + $0x18] sm:$0xf]
        %v1164 = vld [vmem:[#allocation8 + $0x1c] sm:$0xf]
        %v1165 = vld [vmem:[#allocation8 + $0x20] sm:$0xf]
        %v1166 = vld [vmem:[#allocation8 + $0x24] sm:$0xf]
        %v1167 = vld [vmem:[#allocation8 + $0x28] sm:$0xf]
        %v1168 = vld [vmem:[#allocation8 + $0x2c] sm:$0xf]
        %v1169 = vld [vmem:[#allocation8 + $0x30] sm:$0xf]
        %v1170 = vld [vmem:[#allocation8 + $0x34] sm:$0xf]
        %v1171 = vld [vmem:[#allocation8 + $0x38] sm:$0xf]
        %v1172 = vld [vmem:[#allocation8 + $0x3c] sm:$0xf]
        %v1173 = vld [vmem:[%s6] sm:$0x1]
        %v1175 = vperm.slane %v1173, 0
        %v1193 = vunpack.c.l.b16 %v1157
        %v1194 = vunpack.c.l.b16 %v1158
        %v1195 = vunpack.c.l.b16 %v1159
        %v1196 = vunpack.c.l.b16 %v1160
        %v1197 = vunpack.c.l.b16 %v1161
        %v1198 = vunpack.c.l.b16 %v1162
        %v1199 = vunpack.c.l.b16 %v1163
        %v1200 = vunpack.c.l.b16 %v1164
        %v1201 = vunpack.c.l.b16 %v1165
        %v1202 = vunpack.c.l.b16 %v1166
        %v1203 = vunpack.c.l.b16 %v1167
        %v1204 = vunpack.c.l.b16 %v1168
        %v1205 = vunpack.c.l.b16 %v1169
        %v1206 = vunpack.c.l.b16 %v1170
        %v1207 = vunpack.c.l.b16 %v1171
        %v1208 = vunpack.c.l.b16 %v1172
        %v1209 = vpack.c.b16 %v1194, %v1193
        %v1210 = vpack.c.b16 %v1196, %v1195
        %v1211 = vpack.c.b16 %v1198, %v1197
        %v1212 = vpack.c.b16 %v1200, %v1199
        %v1213 = vpack.c.b16 %v1202, %v1201
        %v1214 = vpack.c.b16 %v1204, %v1203
        %v1215 = vpack.c.b16 %v1206, %v1205
        %v1216 = vpack.c.b16 %v1208, %v1207
        %1225 = vmatpush.bf16.msra.mxu0 %v1216
        %1226 = vmatpush.bf16.msra.mxu0 %v1215
        %1227 = vmatpush.bf16.msra.mxu0 %v1214
        %1228 = vmatpush.bf16.msra.mxu0 %v1213
        %1229 = vmatpush.bf16.msra.mxu0 %v1212
        %1230 = vmatpush.bf16.msra.mxu0 %v1211
        %1231 = vmatpush.bf16.msra.mxu0 %v1210
        %1232 = vmatpush.bf16.msra.mxu0 %v1209
        %1233 = vmatmul.bf16.gmra.mxu0 %v851
        %v1234 = vpop.f32.mrf.mxu0
        %v1235 = vadd.f32 %v1175, %v1234
        %v1236 = vpop.f32.mrf.mxu0
        %v1237 = vadd.f32 %v1175, %v1236
        %1238 = vdwg.mxu0
        %v1239 = vadd.f32 %v1155, %v1235
        %v1240 = vadd.f32 %v1156, %v1237
        %v1241 = vmax.f32 %v1239, 0.0
        %v1242 = vmax.f32 %v1240, 0.0
        %v1243 = vrot.slane %v1241, 6
        %v1244 = vrot.slane %v1242, 6
        %vm1245 = vcmp.lt.s32.totalorder %v775, 2
        %v1246 = vsel %vm1245, %v1243, %v1244
        %v1247 = vsel %vm1245, %v1244, %v1243
        %vm1248 = vcmp.ge.s32.totalorder %v799, 2
        %vm1249 = vcmp.ge.s32.totalorder %v800, 2
        %v1250 = vsel %vm1248, %v1247, 0.0
        %v1251 = vsel %vm1249, %v1246, 0.0
        %v1252 = vpack.c.bf16 %v1251, %v1250
        %v1253 = vld [vmem:[#allocation10] sm:$0xf]
        %v1254 = vld [vmem:[#allocation10 + $0x4] sm:$0xf]
        %v1255 = vld [vmem:[#allocation10 + $0x8] sm:$0xf]
        %v1256 = vld [vmem:[#allocation10 + $0xc] sm:$0xf]
        %v1257 = vld [vmem:[#allocation10 + $0x10] sm:$0xf]
        %v1258 = vld [vmem:[#allocation10 + $0x14] sm:$0xf]
        %v1259 = vld [vmem:[#allocation10 + $0x18] sm:$0xf]
        %v1260 = vld [vmem:[#allocation10 + $0x1c] sm:$0xf]
        %v1261 = vld [vmem:[#allocation10 + $0x20] sm:$0xf]
        %v1262 = vld [vmem:[#allocation10 + $0x24] sm:$0xf]
        %v1263 = vld [vmem:[#allocation10 + $0x28] sm:$0xf]
        %v1264 = vld [vmem:[#allocation10 + $0x2c] sm:$0xf]
        %v1265 = vld [vmem:[#allocation10 + $0x30] sm:$0xf]
        %v1266 = vld [vmem:[#allocation10 + $0x34] sm:$0xf]
        %v1267 = vld [vmem:[#allocation10 + $0x38] sm:$0xf]
        %v1268 = vld [vmem:[#allocation10 + $0x3c] sm:$0xf]
        %v1269 = vpack.c.bf16 %v1242, %v1241
        %v1270 = vld [vmem:[#allocation10 + $0x40] sm:$0xf]
        %v1271 = vld [vmem:[#allocation10 + $0x44] sm:$0xf]
        %v1272 = vld [vmem:[#allocation10 + $0x48] sm:$0xf]
        %v1273 = vld [vmem:[#allocation10 + $0x4c] sm:$0xf]
        %v1274 = vld [vmem:[#allocation10 + $0x50] sm:$0xf]
        %v1275 = vld [vmem:[#allocation10 + $0x54] sm:$0xf]
        %v1276 = vld [vmem:[#allocation10 + $0x58] sm:$0xf]
        %v1277 = vld [vmem:[#allocation10 + $0x5c] sm:$0xf]
        %v1278 = vld [vmem:[#allocation10 + $0x60] sm:$0xf]
        %v1279 = vld [vmem:[#allocation10 + $0x64] sm:$0xf]
        %v1280 = vld [vmem:[#allocation10 + $0x68] sm:$0xf]
        %v1281 = vld [vmem:[#allocation10 + $0x6c] sm:$0xf]
        %v1282 = vld [vmem:[#allocation10 + $0x70] sm:$0xf]
        %v1283 = vld [vmem:[#allocation10 + $0x74] sm:$0xf]
        %v1284 = vld [vmem:[#allocation10 + $0x78] sm:$0xf]
        %v1285 = vld [vmem:[#allocation10 + $0x7c] sm:$0xf]
        %v1302 = vunpack.c.l.b16 %v1270
        %v1303 = vunpack.c.l.b16 %v1271
        %v1304 = vunpack.c.l.b16 %v1272
        %v1305 = vunpack.c.l.b16 %v1273
        %v1306 = vunpack.c.l.b16 %v1274
        %v1307 = vunpack.c.l.b16 %v1275
        %v1308 = vunpack.c.l.b16 %v1276
        %v1309 = vunpack.c.l.b16 %v1277
        %v1310 = vunpack.c.l.b16 %v1278
        %v1311 = vunpack.c.l.b16 %v1279
        %v1312 = vunpack.c.l.b16 %v1280
        %v1313 = vunpack.c.l.b16 %v1281
        %v1314 = vunpack.c.l.b16 %v1282
        %v1315 = vunpack.c.l.b16 %v1283
        %v1316 = vunpack.c.l.b16 %v1284
        %v1317 = vunpack.c.l.b16 %v1285
        %v1318 = vpack.c.b16 %v1303, %v1302
        %v1319 = vpack.c.b16 %v1305, %v1304
        %v1320 = vpack.c.b16 %v1307, %v1306
        %v1321 = vpack.c.b16 %v1309, %v1308
        %v1322 = vpack.c.b16 %v1311, %v1310
        %v1323 = vpack.c.b16 %v1313, %v1312
        %v1324 = vpack.c.b16 %v1315, %v1314
        %v1325 = vpack.c.b16 %v1317, %v1316
        %1334 = vmatpush.bf16.msra.mxu0 %v1325
        %1335 = vmatpush.bf16.msra.mxu0 %v1324
        %1336 = vmatpush.bf16.msra.mxu0 %v1323
        %1337 = vmatpush.bf16.msra.mxu0 %v1322
        %1338 = vmatpush.bf16.msra.mxu0 %v1321
        %1339 = vmatpush.bf16.msra.mxu0 %v1320
        %1340 = vmatpush.bf16.msra.mxu0 %v1319
        %1341 = vmatpush.bf16.msra.mxu0 %v1318
        %1342 = vmatmul.bf16.gmra.mxu0 %v1269
        %v1343 = vpop.f32.mrf.mxu0
        %v1344 = vadd.f32 0.0, %v1343
        %v1345 = vpop.f32.mrf.mxu0
        %v1346 = vadd.f32 0.0, %v1345
        %1347 = vdwg.mxu0
        %v1364 = vunpack.c.l.b16 %v1253
        %v1365 = vunpack.c.l.b16 %v1254
        %v1366 = vunpack.c.l.b16 %v1255
        %v1367 = vunpack.c.l.b16 %v1256
        %v1368 = vunpack.c.l.b16 %v1257
        %v1369 = vunpack.c.l.b16 %v1258
        %v1370 = vunpack.c.l.b16 %v1259
        %v1371 = vunpack.c.l.b16 %v1260
        %v1372 = vunpack.c.l.b16 %v1261
        %v1373 = vunpack.c.l.b16 %v1262
        %v1374 = vunpack.c.l.b16 %v1263
        %v1375 = vunpack.c.l.b16 %v1264
        %v1376 = vunpack.c.l.b16 %v1265
        %v1377 = vunpack.c.l.b16 %v1266
        %v1378 = vunpack.c.l.b16 %v1267
        %v1379 = vunpack.c.l.b16 %v1268
        %v1380 = vpack.c.b16 %v1365, %v1364
        %v1381 = vpack.c.b16 %v1367, %v1366
        %v1382 = vpack.c.b16 %v1369, %v1368
        %v1383 = vpack.c.b16 %v1371, %v1370
        %v1384 = vpack.c.b16 %v1373, %v1372
        %v1385 = vpack.c.b16 %v1375, %v1374
        %v1386 = vpack.c.b16 %v1377, %v1376
        %v1387 = vpack.c.b16 %v1379, %v1378
        %1396 = vmatpush.bf16.msra.mxu0 %v1387
        %1397 = vmatpush.bf16.msra.mxu0 %v1386
        %1398 = vmatpush.bf16.msra.mxu0 %v1385
        %1399 = vmatpush.bf16.msra.mxu0 %v1384
        %1400 = vmatpush.bf16.msra.mxu0 %v1383
        %1401 = vmatpush.bf16.msra.mxu0 %v1382
        %1402 = vmatpush.bf16.msra.mxu0 %v1381
        %1403 = vmatpush.bf16.msra.mxu0 %v1380
        %1404 = vmatmul.bf16.gmra.mxu0 %v1252
        %v1405 = vpop.f32.mrf.mxu0
        %v1406 = vadd.f32 %v1344, %v1405
        %v1407 = vpop.f32.mrf.mxu0
        %v1408 = vadd.f32 %v1346, %v1407
        %1409 = vdwg.mxu0
        %v1410 = vld [vmem:[%s8] sm:$0x1]
        %v1412 = vperm.slane %v1410, 0
        %v1414 = vadd.f32 %v1406, %v1412
        %v1415 = vadd.f32 %v1408, %v1412
        %v1416 = vmax.f32 %v1414, 0.0
        %v1417 = vmax.f32 %v1415, 0.0
        %v1418 = vrot.slane %v1416, 6
        %v1419 = vrot.slane %v1417, 6
        %v1420 = vsel %vm1245, %v1418, %v1419
        %v1421 = vsel %vm1245, %v1419, %v1418
        %v1422 = vsel %vm1248, %v1421, 0.0
        %v1423 = vsel %vm1249, %v1420, 0.0
        %v1424 = vpack.c.bf16 %v1423, %v1422
        %v1425 = vld [vmem:[#allocation11] sm:$0xf]
        %v1426 = vld [vmem:[#allocation11 + $0x4] sm:$0xf]
        %v1427 = vld [vmem:[#allocation11 + $0x8] sm:$0xf]
        %v1428 = vld [vmem:[#allocation11 + $0xc] sm:$0xf]
        %v1429 = vld [vmem:[#allocation11 + $0x10] sm:$0xf]
        %v1430 = vld [vmem:[#allocation11 + $0x14] sm:$0xf]
        %v1431 = vld [vmem:[#allocation11 + $0x18] sm:$0xf]
        %v1432 = vld [vmem:[#allocation11 + $0x1c] sm:$0xf]
        %v1433 = vld [vmem:[#allocation11 + $0x20] sm:$0xf]
        %v1434 = vld [vmem:[#allocation11 + $0x24] sm:$0xf]
        %v1435 = vld [vmem:[#allocation11 + $0x28] sm:$0xf]
        %v1436 = vld [vmem:[#allocation11 + $0x2c] sm:$0xf]
        %v1437 = vld [vmem:[#allocation11 + $0x30] sm:$0xf]
        %v1438 = vld [vmem:[#allocation11 + $0x34] sm:$0xf]
        %v1439 = vld [vmem:[#allocation11 + $0x38] sm:$0xf]
        %v1440 = vld [vmem:[#allocation11 + $0x3c] sm:$0xf]
        %v1441 = vpack.c.bf16 %v1417, %v1416
        %v1442 = vld [vmem:[#allocation11 + $0x40] sm:$0xf]
        %v1443 = vld [vmem:[#allocation11 + $0x44] sm:$0xf]
        %v1444 = vld [vmem:[#allocation11 + $0x48] sm:$0xf]
        %v1445 = vld [vmem:[#allocation11 + $0x4c] sm:$0xf]
        %v1446 = vld [vmem:[#allocation11 + $0x50] sm:$0xf]
        %v1447 = vld [vmem:[#allocation11 + $0x54] sm:$0xf]
        %v1448 = vld [vmem:[#allocation11 + $0x58] sm:$0xf]
        %v1449 = vld [vmem:[#allocation11 + $0x5c] sm:$0xf]
        %v1450 = vld [vmem:[#allocation11 + $0x60] sm:$0xf]
        %v1451 = vld [vmem:[#allocation11 + $0x64] sm:$0xf]
        %v1452 = vld [vmem:[#allocation11 + $0x68] sm:$0xf]
        %v1453 = vld [vmem:[#allocation11 + $0x6c] sm:$0xf]
        %v1454 = vld [vmem:[#allocation11 + $0x70] sm:$0xf]
        %v1455 = vld [vmem:[#allocation11 + $0x74] sm:$0xf]
        %v1456 = vld [vmem:[#allocation11 + $0x78] sm:$0xf]
        %v1457 = vld [vmem:[#allocation11 + $0x7c] sm:$0xf]
        %v1474 = vunpack.c.l.b16 %v1442
        %v1475 = vunpack.c.l.b16 %v1443
        %v1476 = vunpack.c.l.b16 %v1444
        %v1477 = vunpack.c.l.b16 %v1445
        %v1478 = vunpack.c.l.b16 %v1446
        %v1479 = vunpack.c.l.b16 %v1447
        %v1480 = vunpack.c.l.b16 %v1448
        %v1481 = vunpack.c.l.b16 %v1449
        %v1482 = vunpack.c.l.b16 %v1450
        %v1483 = vunpack.c.l.b16 %v1451
        %v1484 = vunpack.c.l.b16 %v1452
        %v1485 = vunpack.c.l.b16 %v1453
        %v1486 = vunpack.c.l.b16 %v1454
        %v1487 = vunpack.c.l.b16 %v1455
        %v1488 = vunpack.c.l.b16 %v1456
        %v1489 = vunpack.c.l.b16 %v1457
        %v1490 = vpack.c.b16 %v1475, %v1474
        %v1491 = vpack.c.b16 %v1477, %v1476
        %v1492 = vpack.c.b16 %v1479, %v1478
        %v1493 = vpack.c.b16 %v1481, %v1480
        %v1494 = vpack.c.b16 %v1483, %v1482
        %v1495 = vpack.c.b16 %v1485, %v1484
        %v1496 = vpack.c.b16 %v1487, %v1486
        %v1497 = vpack.c.b16 %v1489, %v1488
        %1506 = vmatpush.bf16.msra.mxu0 %v1497
        %1507 = vmatpush.bf16.msra.mxu0 %v1496
        %1508 = vmatpush.bf16.msra.mxu0 %v1495
        %1509 = vmatpush.bf16.msra.mxu0 %v1494
        %1510 = vmatpush.bf16.msra.mxu0 %v1493
        %1511 = vmatpush.bf16.msra.mxu0 %v1492
        %1512 = vmatpush.bf16.msra.mxu0 %v1491
        %1513 = vmatpush.bf16.msra.mxu0 %v1490
        %1514 = vmatmul.bf16.gmra.mxu0 %v1441
        %v1515 = vpop.f32.mrf.mxu0
        %v1516 = vadd.f32 0.0, %v1515
        %v1517 = vpop.f32.mrf.mxu0
        %v1518 = vadd.f32 0.0, %v1517
        %1519 = vdwg.mxu0
        %v1536 = vunpack.c.l.b16 %v1425
        %v1537 = vunpack.c.l.b16 %v1426
        %v1538 = vunpack.c.l.b16 %v1427
        %v1539 = vunpack.c.l.b16 %v1428
        %v1540 = vunpack.c.l.b16 %v1429
        %v1541 = vunpack.c.l.b16 %v1430
        %v1542 = vunpack.c.l.b16 %v1431
        %v1543 = vunpack.c.l.b16 %v1432
        %v1544 = vunpack.c.l.b16 %v1433
        %v1545 = vunpack.c.l.b16 %v1434
        %v1546 = vunpack.c.l.b16 %v1435
        %v1547 = vunpack.c.l.b16 %v1436
        %v1548 = vunpack.c.l.b16 %v1437
        %v1549 = vunpack.c.l.b16 %v1438
        %v1550 = vunpack.c.l.b16 %v1439
        %v1551 = vunpack.c.l.b16 %v1440
        %v1552 = vpack.c.b16 %v1537, %v1536
        %v1553 = vpack.c.b16 %v1539, %v1538
        %v1554 = vpack.c.b16 %v1541, %v1540
        %v1555 = vpack.c.b16 %v1543, %v1542
        %v1556 = vpack.c.b16 %v1545, %v1544
        %v1557 = vpack.c.b16 %v1547, %v1546
        %v1558 = vpack.c.b16 %v1549, %v1548
        %v1559 = vpack.c.b16 %v1551, %v1550
        %1568 = vmatpush.bf16.msra.mxu0 %v1559
        %1569 = vmatpush.bf16.msra.mxu0 %v1558
        %1570 = vmatpush.bf16.msra.mxu0 %v1557
        %1571 = vmatpush.bf16.msra.mxu0 %v1556
        %1572 = vmatpush.bf16.msra.mxu0 %v1555
        %1573 = vmatpush.bf16.msra.mxu0 %v1554
        %1574 = vmatpush.bf16.msra.mxu0 %v1553
        %1575 = vmatpush.bf16.msra.mxu0 %v1552
        %1576 = vmatmul.bf16.gmra.mxu0 %v1424
        %v1577 = vpop.f32.mrf.mxu0
        %v1578 = vadd.f32 %v1516, %v1577
        %v1579 = vpop.f32.mrf.mxu0
        %v1580 = vadd.f32 %v1518, %v1579
        %1581 = vdwg.mxu0
        %v1582 = vld [vmem:[%s10] sm:$0x1]
        %v1584 = vperm.slane %v1582, 0
        %v1586 = vadd.f32 %v1578, %v1584
        %v1587 = vadd.f32 %v1580, %v1584
        %v1588 = vmax.f32 %v1586, 0.0
        %v1589 = vmax.f32 %v1587, 0.0
        %v1590 = vadd.f32 %v1588, %v1241
        %v1591 = vadd.f32 %v1589, %v1242
        %v1592 = vmax.f32 %v1590, 0.0
        %v1593 = vmax.f32 %v1591, 0.0
        %v1594 = vrot.slane %v1592, 4
        %v1595 = vrot.slane %v1593, 4
        %vm1596 = vcmp.lt.s32.totalorder %v775, 4
        %v1597 = vsel %vm1596, %v1594, %v1595
        %v1598 = vsel %vm1596, %v1595, %v1594
        %vm1599 = vcmp.ge.s32.totalorder %v799, 4
        %vm1600 = vcmp.ge.s32.totalorder %v800, 4
        %v1601 = vsel %vm1599, %v1598, 0.0
        %v1602 = vsel %vm1600, %v1597, 0.0
        %v1603 = vpack.c.bf16 %v1602, %v1601
        %v1604 = vld [vmem:[#allocation13] sm:$0xf]
        %v1605 = vld [vmem:[#allocation13 + $0x4] sm:$0xf]
        %v1606 = vld [vmem:[#allocation13 + $0x8] sm:$0xf]
        %v1607 = vld [vmem:[#allocation13 + $0xc] sm:$0xf]
        %v1608 = vld [vmem:[#allocation13 + $0x10] sm:$0xf]
        %v1609 = vld [vmem:[#allocation13 + $0x14] sm:$0xf]
        %v1610 = vld [vmem:[#allocation13 + $0x18] sm:$0xf]
        %v1611 = vld [vmem:[#allocation13 + $0x1c] sm:$0xf]
        %v1612 = vld [vmem:[#allocation13 + $0x20] sm:$0xf]
        %v1613 = vld [vmem:[#allocation13 + $0x24] sm:$0xf]
        %v1614 = vld [vmem:[#allocation13 + $0x28] sm:$0xf]
        %v1615 = vld [vmem:[#allocation13 + $0x2c] sm:$0xf]
        %v1616 = vld [vmem:[#allocation13 + $0x30] sm:$0xf]
        %v1617 = vld [vmem:[#allocation13 + $0x34] sm:$0xf]
        %v1618 = vld [vmem:[#allocation13 + $0x38] sm:$0xf]
        %v1619 = vld [vmem:[#allocation13 + $0x3c] sm:$0xf]
        %v1620 = vpack.c.bf16 %v1593, %v1592
        %v1621 = vld [vmem:[#allocation13 + $0x40] sm:$0xf]
        %v1622 = vld [vmem:[#allocation13 + $0x44] sm:$0xf]
        %v1623 = vld [vmem:[#allocation13 + $0x48] sm:$0xf]
        %v1624 = vld [vmem:[#allocation13 + $0x4c] sm:$0xf]
        %v1625 = vld [vmem:[#allocation13 + $0x50] sm:$0xf]
        %v1626 = vld [vmem:[#allocation13 + $0x54] sm:$0xf]
        %v1627 = vld [vmem:[#allocation13 + $0x58] sm:$0xf]
        %v1628 = vld [vmem:[#allocation13 + $0x5c] sm:$0xf]
        %v1629 = vld [vmem:[#allocation13 + $0x60] sm:$0xf]
        %v1630 = vld [vmem:[#allocation13 + $0x64] sm:$0xf]
        %v1631 = vld [vmem:[#allocation13 + $0x68] sm:$0xf]
        %v1632 = vld [vmem:[#allocation13 + $0x6c] sm:$0xf]
        %v1633 = vld [vmem:[#allocation13 + $0x70] sm:$0xf]
        %v1634 = vld [vmem:[#allocation13 + $0x74] sm:$0xf]
        %v1635 = vld [vmem:[#allocation13 + $0x78] sm:$0xf]
        %v1636 = vld [vmem:[#allocation13 + $0x7c] sm:$0xf]
        %v1653 = vunpack.c.l.b16 %v1621
        %v1654 = vunpack.c.l.b16 %v1622
        %v1655 = vunpack.c.l.b16 %v1623
        %v1656 = vunpack.c.l.b16 %v1624
        %v1657 = vunpack.c.l.b16 %v1625
        %v1658 = vunpack.c.l.b16 %v1626
        %v1659 = vunpack.c.l.b16 %v1627
        %v1660 = vunpack.c.l.b16 %v1628
        %v1661 = vunpack.c.l.b16 %v1629
        %v1662 = vunpack.c.l.b16 %v1630
        %v1663 = vunpack.c.l.b16 %v1631
        %v1664 = vunpack.c.l.b16 %v1632
        %v1665 = vunpack.c.l.b16 %v1633
        %v1666 = vunpack.c.l.b16 %v1634
        %v1667 = vunpack.c.l.b16 %v1635
        %v1668 = vunpack.c.l.b16 %v1636
        %v1669 = vpack.c.b16 %v1654, %v1653
        %v1670 = vpack.c.b16 %v1656, %v1655
        %v1671 = vpack.c.b16 %v1658, %v1657
        %v1672 = vpack.c.b16 %v1660, %v1659
        %v1673 = vpack.c.b16 %v1662, %v1661
        %v1674 = vpack.c.b16 %v1664, %v1663
        %v1675 = vpack.c.b16 %v1666, %v1665
        %v1676 = vpack.c.b16 %v1668, %v1667
        %1685 = vmatpush.bf16.msra.mxu0 %v1676
        %1686 = vmatpush.bf16.msra.mxu0 %v1675
        %1687 = vmatpush.bf16.msra.mxu0 %v1674
        %1688 = vmatpush.bf16.msra.mxu0 %v1673
        %1689 = vmatpush.bf16.msra.mxu0 %v1672
        %1690 = vmatpush.bf16.msra.mxu0 %v1671
        %1691 = vmatpush.bf16.msra.mxu0 %v1670
        %1692 = vmatpush.bf16.msra.mxu0 %v1669
        %1693 = vmatmul.bf16.gmra.mxu0 %v1620
        %v1694 = vpop.f32.mrf.mxu0
        %v1695 = vadd.f32 0.0, %v1694
        %v1696 = vpop.f32.mrf.mxu0
        %v1697 = vadd.f32 0.0, %v1696
        %1698 = vdwg.mxu0
        %v1715 = vunpack.c.l.b16 %v1604
        %v1716 = vunpack.c.l.b16 %v1605
        %v1717 = vunpack.c.l.b16 %v1606
        %v1718 = vunpack.c.l.b16 %v1607
        %v1719 = vunpack.c.l.b16 %v1608
        %v1720 = vunpack.c.l.b16 %v1609
        %v1721 = vunpack.c.l.b16 %v1610
        %v1722 = vunpack.c.l.b16 %v1611
        %v1723 = vunpack.c.l.b16 %v1612
        %v1724 = vunpack.c.l.b16 %v1613
        %v1725 = vunpack.c.l.b16 %v1614
        %v1726 = vunpack.c.l.b16 %v1615
        %v1727 = vunpack.c.l.b16 %v1616
        %v1728 = vunpack.c.l.b16 %v1617
        %v1729 = vunpack.c.l.b16 %v1618
        %v1730 = vunpack.c.l.b16 %v1619
        %v1731 = vpack.c.b16 %v1716, %v1715
        %v1732 = vpack.c.b16 %v1718, %v1717
        %v1733 = vpack.c.b16 %v1720, %v1719
        %v1734 = vpack.c.b16 %v1722, %v1721
        %v1735 = vpack.c.b16 %v1724, %v1723
        %v1736 = vpack.c.b16 %v1726, %v1725
        %v1737 = vpack.c.b16 %v1728, %v1727
        %v1738 = vpack.c.b16 %v1730, %v1729
        %1747 = vmatpush.bf16.msra.mxu0 %v1738
        %1748 = vmatpush.bf16.msra.mxu0 %v1737
        %1749 = vmatpush.bf16.msra.mxu0 %v1736
        %1750 = vmatpush.bf16.msra.mxu0 %v1735
        %1751 = vmatpush.bf16.msra.mxu0 %v1734
        %1752 = vmatpush.bf16.msra.mxu0 %v1733
        %1753 = vmatpush.bf16.msra.mxu0 %v1732
        %1754 = vmatpush.bf16.msra.mxu0 %v1731
        %1755 = vmatmul.bf16.gmra.mxu0 %v1603
        %v1756 = vpop.f32.mrf.mxu0
        %v1757 = vadd.f32 %v1695, %v1756
        %v1758 = vpop.f32.mrf.mxu0
        %v1759 = vadd.f32 %v1697, %v1758
        %1760 = vdwg.mxu0
        %v1761 = vld [vmem:[%s12] sm:$0x1]
        %v1763 = vperm.slane %v1761, 0
        %v1765 = vadd.f32 %v1757, %v1763
        %v1766 = vadd.f32 %v1759, %v1763
        %v1767 = vmax.f32 %v1765, 0.0
        %v1768 = vmax.f32 %v1766, 0.0
        %v1769 = vrot.slane %v1767, 4
        %v1770 = vrot.slane %v1768, 4
        %v1771 = vsel %vm1596, %v1769, %v1770
        %v1772 = vsel %vm1596, %v1770, %v1769
        %v1773 = vsel %vm1599, %v1772, 0.0
        %v1774 = vsel %vm1600, %v1771, 0.0
        %v1775 = vpack.c.bf16 %v1774, %v1773
        %v1776 = vld [vmem:[#allocation14] sm:$0xf]
        %v1777 = vld [vmem:[#allocation14 + $0x4] sm:$0xf]
        %v1778 = vld [vmem:[#allocation14 + $0x8] sm:$0xf]
        %v1779 = vld [vmem:[#allocation14 + $0xc] sm:$0xf]
        %v1780 = vld [vmem:[#allocation14 + $0x10] sm:$0xf]
        %v1781 = vld [vmem:[#allocation14 + $0x14] sm:$0xf]
        %v1782 = vld [vmem:[#allocation14 + $0x18] sm:$0xf]
        %v1783 = vld [vmem:[#allocation14 + $0x1c] sm:$0xf]
        %v1784 = vld [vmem:[#allocation14 + $0x20] sm:$0xf]
        %v1785 = vld [vmem:[#allocation14 + $0x24] sm:$0xf]
        %v1786 = vld [vmem:[#allocation14 + $0x28] sm:$0xf]
        %v1787 = vld [vmem:[#allocation14 + $0x2c] sm:$0xf]
        %v1788 = vld [vmem:[#allocation14 + $0x30] sm:$0xf]
        %v1789 = vld [vmem:[#allocation14 + $0x34] sm:$0xf]
        %v1790 = vld [vmem:[#allocation14 + $0x38] sm:$0xf]
        %v1791 = vld [vmem:[#allocation14 + $0x3c] sm:$0xf]
        %v1792 = vpack.c.bf16 %v1768, %v1767
        %v1793 = vld [vmem:[#allocation14 + $0x40] sm:$0xf]
        %v1794 = vld [vmem:[#allocation14 + $0x44] sm:$0xf]
        %v1795 = vld [vmem:[#allocation14 + $0x48] sm:$0xf]
        %v1796 = vld [vmem:[#allocation14 + $0x4c] sm:$0xf]
        %v1797 = vld [vmem:[#allocation14 + $0x50] sm:$0xf]
        %v1798 = vld [vmem:[#allocation14 + $0x54] sm:$0xf]
        %v1799 = vld [vmem:[#allocation14 + $0x58] sm:$0xf]
        %v1800 = vld [vmem:[#allocation14 + $0x5c] sm:$0xf]
        %v1801 = vld [vmem:[#allocation14 + $0x60] sm:$0xf]
        %v1802 = vld [vmem:[#allocation14 + $0x64] sm:$0xf]
        %v1803 = vld [vmem:[#allocation14 + $0x68] sm:$0xf]
        %v1804 = vld [vmem:[#allocation14 + $0x6c] sm:$0xf]
        %v1805 = vld [vmem:[#allocation14 + $0x70] sm:$0xf]
        %v1806 = vld [vmem:[#allocation14 + $0x74] sm:$0xf]
        %v1807 = vld [vmem:[#allocation14 + $0x78] sm:$0xf]
        %v1808 = vld [vmem:[#allocation14 + $0x7c] sm:$0xf]
        %v1825 = vunpack.c.l.b16 %v1793
        %v1826 = vunpack.c.l.b16 %v1794
        %v1827 = vunpack.c.l.b16 %v1795
        %v1828 = vunpack.c.l.b16 %v1796
        %v1829 = vunpack.c.l.b16 %v1797
        %v1830 = vunpack.c.l.b16 %v1798
        %v1831 = vunpack.c.l.b16 %v1799
        %v1832 = vunpack.c.l.b16 %v1800
        %v1833 = vunpack.c.l.b16 %v1801
        %v1834 = vunpack.c.l.b16 %v1802
        %v1835 = vunpack.c.l.b16 %v1803
        %v1836 = vunpack.c.l.b16 %v1804
        %v1837 = vunpack.c.l.b16 %v1805
        %v1838 = vunpack.c.l.b16 %v1806
        %v1839 = vunpack.c.l.b16 %v1807
        %v1840 = vunpack.c.l.b16 %v1808
        %v1841 = vpack.c.b16 %v1826, %v1825
        %v1842 = vpack.c.b16 %v1828, %v1827
        %v1843 = vpack.c.b16 %v1830, %v1829
        %v1844 = vpack.c.b16 %v1832, %v1831
        %v1845 = vpack.c.b16 %v1834, %v1833
        %v1846 = vpack.c.b16 %v1836, %v1835
        %v1847 = vpack.c.b16 %v1838, %v1837
        %v1848 = vpack.c.b16 %v1840, %v1839
        %1857 = vmatpush.bf16.msra.mxu0 %v1848
        %1858 = vmatpush.bf16.msra.mxu0 %v1847
        %1859 = vmatpush.bf16.msra.mxu0 %v1846
        %1860 = vmatpush.bf16.msra.mxu0 %v1845
        %1861 = vmatpush.bf16.msra.mxu0 %v1844
        %1862 = vmatpush.bf16.msra.mxu0 %v1843
        %1863 = vmatpush.bf16.msra.mxu0 %v1842
        %1864 = vmatpush.bf16.msra.mxu0 %v1841
        %1865 = vmatmul.bf16.gmra.mxu0 %v1792
        %v1866 = vpop.f32.mrf.mxu0
        %v1867 = vadd.f32 0.0, %v1866
        %v1868 = vpop.f32.mrf.mxu0
        %v1869 = vadd.f32 0.0, %v1868
        %1870 = vdwg.mxu0
        %v1887 = vunpack.c.l.b16 %v1776
        %v1888 = vunpack.c.l.b16 %v1777
        %v1889 = vunpack.c.l.b16 %v1778
        %v1890 = vunpack.c.l.b16 %v1779
        %v1891 = vunpack.c.l.b16 %v1780
        %v1892 = vunpack.c.l.b16 %v1781
        %v1893 = vunpack.c.l.b16 %v1782
        %v1894 = vunpack.c.l.b16 %v1783
        %v1895 = vunpack.c.l.b16 %v1784
        %v1896 = vunpack.c.l.b16 %v1785
        %v1897 = vunpack.c.l.b16 %v1786
        %v1898 = vunpack.c.l.b16 %v1787
        %v1899 = vunpack.c.l.b16 %v1788
        %v1900 = vunpack.c.l.b16 %v1789
        %v1901 = vunpack.c.l.b16 %v1790
        %v1902 = vunpack.c.l.b16 %v1791
        %v1903 = vpack.c.b16 %v1888, %v1887
        %v1904 = vpack.c.b16 %v1890, %v1889
        %v1905 = vpack.c.b16 %v1892, %v1891
        %v1906 = vpack.c.b16 %v1894, %v1893
        %v1907 = vpack.c.b16 %v1896, %v1895
        %v1908 = vpack.c.b16 %v1898, %v1897
        %v1909 = vpack.c.b16 %v1900, %v1899
        %v1910 = vpack.c.b16 %v1902, %v1901
        %1919 = vmatpush.bf16.msra.mxu0 %v1910
        %1920 = vmatpush.bf16.msra.mxu0 %v1909
        %1921 = vmatpush.bf16.msra.mxu0 %v1908
        %1922 = vmatpush.bf16.msra.mxu0 %v1907
        %1923 = vmatpush.bf16.msra.mxu0 %v1906
        %1924 = vmatpush.bf16.msra.mxu0 %v1905
        %1925 = vmatpush.bf16.msra.mxu0 %v1904
        %1926 = vmatpush.bf16.msra.mxu0 %v1903
        %1927 = vmatmul.bf16.gmra.mxu0 %v1775
        %v1928 = vpop.f32.mrf.mxu0
        %v1929 = vadd.f32 %v1867, %v1928
        %v1930 = vpop.f32.mrf.mxu0
        %v1931 = vadd.f32 %v1869, %v1930
        %1932 = vdwg.mxu0
        %v1933 = vld [vmem:[%s14] sm:$0x1]
        %v1935 = vperm.slane %v1933, 0
        %v1937 = vadd.f32 %v1929, %v1935
        %v1938 = vadd.f32 %v1931, %v1935
        %v1939 = vmax.f32 %v1937, 0.0
        %v1940 = vmax.f32 %v1938, 0.0
        %v1941 = vld [vmem:[#allocation16] sm:$0xf]
        %v1942 = vld [vmem:[#allocation16 + $0x4] sm:$0xf]
        %v1943 = vld [vmem:[#allocation16 + $0x8] sm:$0xf]
        %v1944 = vld [vmem:[#allocation16 + $0xc] sm:$0xf]
        %v1945 = vld [vmem:[#allocation16 + $0x10] sm:$0xf]
        %v1946 = vld [vmem:[#allocation16 + $0x14] sm:$0xf]
        %v1947 = vld [vmem:[#allocation16 + $0x18] sm:$0xf]
        %v1948 = vld [vmem:[#allocation16 + $0x1c] sm:$0xf]
        %v1949 = vld [vmem:[#allocation16 + $0x20] sm:$0xf]
        %v1950 = vld [vmem:[#allocation16 + $0x24] sm:$0xf]
        %v1951 = vld [vmem:[#allocation16 + $0x28] sm:$0xf]
        %v1952 = vld [vmem:[#allocation16 + $0x2c] sm:$0xf]
        %v1953 = vld [vmem:[#allocation16 + $0x30] sm:$0xf]
        %v1954 = vld [vmem:[#allocation16 + $0x34] sm:$0xf]
        %v1955 = vld [vmem:[#allocation16 + $0x38] sm:$0xf]
        %v1956 = vld [vmem:[#allocation16 + $0x3c] sm:$0xf]
        %v1957 = vld [vmem:[%s16] sm:$0x1]
        %v1959 = vperm.slane %v1957, 0
        %v1977 = vunpack.c.l.b16 %v1941
        %v1978 = vunpack.c.l.b16 %v1942
        %v1979 = vunpack.c.l.b16 %v1943
        %v1980 = vunpack.c.l.b16 %v1944
        %v1981 = vunpack.c.l.b16 %v1945
        %v1982 = vunpack.c.l.b16 %v1946
        %v1983 = vunpack.c.l.b16 %v1947
        %v1984 = vunpack.c.l.b16 %v1948
        %v1985 = vunpack.c.l.b16 %v1949
        %v1986 = vunpack.c.l.b16 %v1950
        %v1987 = vunpack.c.l.b16 %v1951
        %v1988 = vunpack.c.l.b16 %v1952
        %v1989 = vunpack.c.l.b16 %v1953
        %v1990 = vunpack.c.l.b16 %v1954
        %v1991 = vunpack.c.l.b16 %v1955
        %v1992 = vunpack.c.l.b16 %v1956
        %v1993 = vpack.c.b16 %v1978, %v1977
        %v1994 = vpack.c.b16 %v1980, %v1979
        %v1995 = vpack.c.b16 %v1982, %v1981
        %v1996 = vpack.c.b16 %v1984, %v1983
        %v1997 = vpack.c.b16 %v1986, %v1985
        %v1998 = vpack.c.b16 %v1988, %v1987
        %v1999 = vpack.c.b16 %v1990, %v1989
        %v2000 = vpack.c.b16 %v1992, %v1991
        %2009 = vmatpush.bf16.msra.mxu0 %v2000
        %2010 = vmatpush.bf16.msra.mxu0 %v1999
        %2011 = vmatpush.bf16.msra.mxu0 %v1998
        %2012 = vmatpush.bf16.msra.mxu0 %v1997
        %2013 = vmatpush.bf16.msra.mxu0 %v1996
        %2014 = vmatpush.bf16.msra.mxu0 %v1995
        %2015 = vmatpush.bf16.msra.mxu0 %v1994
        %2016 = vmatpush.bf16.msra.mxu0 %v1993
        %2017 = vmatmul.bf16.gmra.mxu0 %v1620
        %v2018 = vpop.f32.mrf.mxu0
        %v2019 = vadd.f32 %v1959, %v2018
        %v2020 = vpop.f32.mrf.mxu0
        %v2021 = vadd.f32 %v1959, %v2020
        %2022 = vdwg.mxu0
        %v2023 = vadd.f32 %v1939, %v2019
        %v2024 = vadd.f32 %v1940, %v2021
        %v2025 = vmax.f32 %v2023, 0.0
        %v2026 = vmax.f32 %v2024, 0.0
        %v2027 = vpack.c.bf16 %v2026, %v2025
        %v2028 = vld [vmem:[#allocation17] sm:$0xf]
        %v2029 = vld [vmem:[#allocation17 + $0x4] sm:$0xf]
        %v2030 = vld [vmem:[#allocation17 + $0x8] sm:$0xf]
        %v2031 = vld [vmem:[#allocation17 + $0xc] sm:$0xf]
        %v2032 = vld [vmem:[#allocation17 + $0x10] sm:$0xf]
        %v2033 = vld [vmem:[#allocation17 + $0x14] sm:$0xf]
        %v2034 = vld [vmem:[#allocation17 + $0x18] sm:$0xf]
        %v2035 = vld [vmem:[#allocation17 + $0x1c] sm:$0xf]
        %v2036 = vld [vmem:[#allocation17 + $0x20] sm:$0xf]
        %v2037 = vld [vmem:[#allocation17 + $0x24] sm:$0xf]
        %v2038 = vld [vmem:[#allocation17 + $0x28] sm:$0xf]
        %v2039 = vld [vmem:[#allocation17 + $0x2c] sm:$0xf]
        %v2040 = vld [vmem:[#allocation17 + $0x30] sm:$0xf]
        %v2041 = vld [vmem:[#allocation17 + $0x34] sm:$0xf]
        %v2042 = vld [vmem:[#allocation17 + $0x38] sm:$0xf]
        %v2043 = vld [vmem:[#allocation17 + $0x3c] sm:$0xf]
        %v2044 = vld [vmem:[%s18] sm:$0x1]
        %v2046 = vperm.slane %v2044, 0
        %v2064 = vunpack.c.l.b16 %v2028
        %v2065 = vunpack.c.l.b16 %v2029
        %v2066 = vunpack.c.l.b16 %v2030
        %v2067 = vunpack.c.l.b16 %v2031
        %v2068 = vunpack.c.l.b16 %v2032
        %v2069 = vunpack.c.l.b16 %v2033
        %v2070 = vunpack.c.l.b16 %v2034
        %v2071 = vunpack.c.l.b16 %v2035
        %v2072 = vunpack.c.l.b16 %v2036
        %v2073 = vunpack.c.l.b16 %v2037
        %v2074 = vunpack.c.l.b16 %v2038
        %v2075 = vunpack.c.l.b16 %v2039
        %v2076 = vunpack.c.l.b16 %v2040
        %v2077 = vunpack.c.l.b16 %v2041
        %v2078 = vunpack.c.l.b16 %v2042
        %v2079 = vunpack.c.l.b16 %v2043
        %v2080 = vpack.c.b16 %v2065, %v2064
        %v2081 = vpack.c.b16 %v2067, %v2066
        %v2082 = vpack.c.b16 %v2069, %v2068
        %v2083 = vpack.c.b16 %v2071, %v2070
        %v2084 = vpack.c.b16 %v2073, %v2072
        %v2085 = vpack.c.b16 %v2075, %v2074
        %v2086 = vpack.c.b16 %v2077, %v2076
        %v2087 = vpack.c.b16 %v2079, %v2078
        %2096 = vmatpush.bf16.msra.mxu0 %v2087
        %2097 = vmatpush.bf16.msra.mxu0 %v2086
        %2098 = vmatpush.bf16.msra.mxu0 %v2085
        %2099 = vmatpush.bf16.msra.mxu0 %v2084
        %2100 = vmatpush.bf16.msra.mxu0 %v2083
        %2101 = vmatpush.bf16.msra.mxu0 %v2082
        %2102 = vmatpush.bf16.msra.mxu0 %v2081
        %2103 = vmatpush.bf16.msra.mxu0 %v2080
        %2104 = vmatmul.bf16.gmra.mxu0 %v2027
        %v2105 = vpop.f32.mrf.mxu0
        %v2106 = vadd.f32 %v2046, %v2105
        %v2107 = vpop.f32.mrf.mxu0
        %v2108 = vadd.f32 %v2046, %v2107
        %2109 = vdwg.mxu0
        %2110 = vst [vmem:[%s771] sm:$0xff] %v2106
        %2111 = vst [vmem:[%s771 + $0x8] sm:$0xff] %v2108
        %s2112 = sand.u32 %s453, 1
        %s2113 = scalar_lea.sflag [#allocation4], %s2112
        %s2114 = sand.u32 %s453, 1
        %s2115 = smul.addr %s2114, 16
        %s2116 = scalar_lea.vmem [#allocation19], %s2115
        // Predicated region
        $region137: #{tpu_custom_call.1} parent=95 // pred_check
          %p2117 = pneg %p463
        $region138: #{tpu_custom_call.1} parent=95 // pred_check_branch
          %2119 = sbr.rel (%p2117) target = $region140
        $region139: #{tpu_custom_call.1} parent=95 // pred_region
          %s2120 = smul.u32 2, %s41
          %2122 = vsyncadd %s2113, 0
          %s2123 = smul.addr %s2120, 8
          %s2124 = scalar_lea.hbm %s19, %s2123
          %s2125 = sshll.u32 %s2116, 4
          %s2126 = int_to_ptr.vmem [resolvable:$true] %s2125
          %s2127 = sshll.u32 %s2124, 4
          %s2128 = int_to_ptr.hbm [resolvable:$true] %s2127
          %2133 = dma.vmem_to_hbm [thread:$0]  %s2126, 256, %s2128, %s2113, 128, 128, 8
        $region140: #{tpu_custom_call.1} parent=95 // pred_fallthru
          _
      $region96: #{tpu_custom_call.1} parent=5 // pred_fallthru
        _
      %p2134 = scmp.le.s32.totalorder 2, %s36
      // Predicated region
      $region141: #{tpu_custom_call.1} parent=5 // pred_check
        %p2135 = pneg %p2134
      $region142: #{tpu_custom_call.1} parent=5 // pred_check_branch
        %2137 = sbr.rel (%p2135) target = $region144
      $region143: #{tpu_custom_call.1} parent=5 // pred_region
        %s2138 = ssub.s32 %s36, 2
        // Predicated region
        $region145: #{tpu_custom_call.1} parent=143 // pred_check
          %p2139 = pneg %p469
        $region146: #{tpu_custom_call.1} parent=143 // pred_check_branch
          %2141 = sbr.rel (%p2139) target = $region148
        $region147: #{tpu_custom_call.1} parent=143 // pred_region
          %s2142 = sand.u32 %s454, 1
          %s2143 = scalar_lea.sflag [#allocation4], %s2142
          %s2144 = sand.u32 %s454, 1
          %s2145 = smul.addr %s2144, 16
          %s2146 = scalar_lea.vmem [#allocation19], %s2145
          %2148 = dma.done %s2143, 256
        $region148: #{tpu_custom_call.1} parent=143 // pred_fallthru
          _
      $region144: #{tpu_custom_call.1} parent=5 // pred_fallthru
        _
    $region6: #{tpu_custom_call.1} parent=1 // loop_footer
      %s40 = sadd.s32 1, %s36
    $region7: #{tpu_custom_call.1} parent=1 // loop_footer_branch
      %35 = sbr.rel target = $region3
    $region8: #{tpu_custom_call.1} parent=1 // loop_exit
      _
    %2149 = vsyncpa [#allocation3], 1
    %s2150 = scalar_lea.sflag [#allocation3], 1
    %2151 = vsyncpa %s2150, 1
    %2152 = vsyncpa [#allocation6], 1
    %2153 = vsyncpa [#allocation9], 1
    %2154 = vsyncpa [#allocation12], 1
    %2155 = vsyncpa [#allocation15], 1
    %2156 = vsyncpa [#allocation18], 1
    %2157 = vsyncpa [#allocation4], 1
    %s2158 = scalar_lea.sflag [#allocation4], 1
    %2159 = vsyncpa %s2158, 1

</llo_original>
